<compile_context>
chip_gen: v6e
topology: v6e:2x2x1
jax: 0.10.0
libtpu: 0.0.40
codegen_flags: <defaults>
</compile_context>

<pallas_src>
import jax
import jax.numpy as jnp
from jax.experimental import pallas as pl
from jax.experimental.pallas import tpu as pltpu

# ---------------- model dims (small, consistent with the module) ----------------
BATCH = 8
SEQ_LEN = 8          # captions_len
CNN_FEAT = 64        # cnn_feature_size
EMB_DIM = 32         # emb_dim
HIDDEN = 32          # hidden_dim
VOCAB = 128          # vocab_size
N_LAYERS = 2         # num_lstm_layers (kernel written for 2 layers)


# ---------------------------------- kernel ----------------------------------
def caption_kernel(
    img_ref,                 # [B, F]
    whcc0_ref, bhcc0_ref,    # init projection -> [h0|h1|c0|c1] : [F, 4H], [1, 4H]
    caps_ref,                # [T*B, 1] int32, time-major token column
    gtab_ref,                # [V, 8H] layer-0 input-gate table (b0 baked in) with
                             #         b1 replicated in the layer-1 lanes
    wblk_ref,                # [2H, 8H] block RHS: rows [h0 ; h1],
                             #          interleaved cols [gates0(t+1) | gates1(t)]
    wout_ref, bout_ref,      # [H, V], [1, V]
    logits_ref,              # [B, T*V]  lane-dense output
    h1s_ref,                 # VMEM scratch [(T-1)*B, H]
):
    B = img_ref.shape[0]
    H2 = wblk_ref.shape[0]          # 2H
    H = H2 // 2
    V = wout_ref.shape[1]
    T = logits_ref.shape[1] // V
    f32 = jnp.float32

    # ---- init LSTM state: img @ [Wh0|Wh0|Wc0|Wc0] -> [h0|h1|c0|c1] lanes ----
    init = jnp.dot(img_ref[...], whcc0_ref[...],
                   preferred_element_type=f32) + bhcc0_ref[...]          # [B, 4H]
    hh = init[:, :H2]               # [h0(0) | h1(0)]
    cc = init[:, H2:]               # [c0(0) | c1(0)]

    # ---- all layer-0 input gates upfront: one-hot(tokens) @ G (K = V MXU pass).
    #      Off the recurrent chain; layer-1 lanes of every row carry b1. ----
    tok = caps_ref[...]                                                  # [T*B, 1]
    iota_v = jax.lax.broadcasted_iota(jnp.int32, (T * B, V), 1)
    onehot = jnp.where(tok == iota_v, 1.0, 0.0).astype(f32)              # [T*B, V]
    xg_all = jnp.dot(onehot, gtab_ref[...],
                     preferred_element_type=f32)                         # [T*B, 8H]

    wblk = wblk_ref[...]

    def combined_cell(gates, cc_prev):
        # gates: [B, 8H] interleaved [i0 i1 f0 f1 g0 g1 o0 o1]; cc_prev: [B, 2H]=[c0|c1].
        sg = jax.nn.sigmoid(gates)                  # ONE stacked EUP pass, both cells
        i = sg[:, 0 * H2:1 * H2]
        f = sg[:, 1 * H2:2 * H2]
        g = 2.0 * sg[:, 2 * H2:3 * H2] - 1.0        # tanh(g) via pre-scaled sigmoid
        o = sg[:, 3 * H2:4 * H2]
        cc_new = f * cc_prev + i * g
        hh_new = o * jnp.tanh(cc_new)               # ONE stacked tanh, both cells
        return hh_new, cc_new                       # [h0(t+1)|h1(t)], [c0(t+1)|c1(t)]

    # ---- pipeline prologue: produce h0(1), c0(1); layer-1 half is discarded ----
    m = jnp.dot(hh, wblk, preferred_element_type=f32)                    # [B, 8H]
    hh_p, cc_p = combined_cell(m + xg_all[0:B, :], cc)
    hh = jnp.concatenate([hh_p[:, :H], hh[:, H:]], axis=1)               # [h0(1) | h1(0)]
    cc = jnp.concatenate([cc_p[:, :H], cc[:, H:]], axis=1)               # [c0(1) | c1(0)]

    # ---- pipelined recurrence (fully unrolled): iteration t closes layer-1(t)
    #      and opens layer-0(t+1) with ONE matmul + ONE sigmoid + ONE tanh on
    #      the serial chain; the cell output is directly the next LHS. ----
    for t in range(1, T):
        m = jnp.dot(hh, wblk, preferred_element_type=f32)                # [B, 8H]
        hh, cc = combined_cell(m + xg_all[t * B:(t + 1) * B, :], cc)
        h1s_ref[(t - 1) * B:t * B, :] = hh[:, H:]    # h1(t) -> scratch (off-path)
        # (at t == T-1 the layer-0 half computes a throwaway step; never read)

    # ---- output projection hoisted off the recurrent path: one fat matmul ----
    out_all = jnp.dot(h1s_ref[...], wout_ref[...],
                      preferred_element_type=f32) + bout_ref[...]        # [(T-1)*B, V]

    # logits layout [B, T*V]; V == 128 -> every store is one full lane-aligned
    # vreg.  Step-0 logits stay zero (as in the reference module).
    logits_ref[:, 0:V] = jnp.zeros((B, V), f32)
    for t in range(1, T):
        logits_ref[:, t * V:(t + 1) * V] = out_all[(t - 1) * B:t * B, :]


# --------------------------- one-time parameter prep -------------------------
def prepare_caption_params(params):
    """Fuse / pre-scale raw CaptionNet params into the kernel layout.  Call ONCE
    (outside the per-call path).  NOTE: g-gate columns are pre-scaled x2 here —
    never feed the returned dict back into this function (double-scaling)."""
    H = params["whh0"].shape[0]
    f32 = jnp.float32

    # g-gate (3rd quarter) columns x2 so the kernel uses one full-width sigmoid
    # and recovers tanh(g) = 2*sigmoid(2g) - 1.
    gscale = jnp.concatenate(
        [jnp.ones((1, 2 * H), f32), 2.0 * jnp.ones((1, H), f32),
         jnp.ones((1, H), f32)], axis=1)
    wih0 = params["wih0"] * gscale
    whh0 = params["whh0"] * gscale
    b0 = params["b0"] * gscale
    wih1 = params["wih1"] * gscale
    whh1 = params["whh1"] * gscale
    b1 = params["b1"] * gscale

    def interleave(w_l0, w_l1):
        # [R, 4H] x 2 -> [R, 8H] with per-gate column blocks [layer0 | layer1].
        R = w_l0.shape[0]
        return jnp.concatenate(
            [w_l0.reshape(R, 4, 1, H), w_l1.reshape(R, 4, 1, H)], axis=2
        ).reshape(R, 8 * H)

    V = params["emb"].shape[0]
    # Layer-0 input-gate table (b0 baked in); layer-1 lanes carry b1 (a one-hot
    # row sums to exactly one copy of it), so the per-step bias add is free.
    g_l0 = params["emb"] @ wih0 + b0                             # [V, 4H]
    g_l1 = jnp.broadcast_to(b1, (V, 4 * H))                      # [V, 4H]
    # Block recurrent RHS: rows [h0 ; h1]; layer-0 cols = [whh0 ; 0],
    # layer-1 cols = [wih1 ; whh1].
    w_l0 = jnp.concatenate([whh0, jnp.zeros_like(whh1)], axis=0)  # [2H, 4H]
    w_l1 = jnp.concatenate([wih1, whh1], axis=0)                  # [2H, 4H]

    return {
        "whcc0": jnp.concatenate(
            [params["wh0"], params["wh0"], params["wc0"], params["wc0"]], axis=1),
        "bhcc0": jnp.concatenate(
            [params["bh0"], params["bh0"], params["bc0"], params["bc0"]], axis=1),
        "g_table": interleave(g_l0, g_l1),                        # [V, 8H]
        "w_block": interleave(w_l0, w_l1),                        # [2H, 8H]
        "wout": params["wout"],
        "bout": params["bout"],
    }


# --------------------------------- wrapper ----------------------------------
@jax.jit
def caption_net_forward(image_vectors, captions_ix, fused):
    B, T = captions_ix.shape
    H = fused["wout"].shape[0]
    V = fused["wout"].shape[1]

    # Only per-call glue: time-major flat token column (one tiny XLA op on
    # [B, T] int32).  Everything else was fused at prepare_caption_params time.
    caps_tm = captions_ix.T.reshape(T * B, 1).astype(jnp.int32)

    vmem = lambda: pl.BlockSpec(memory_space=pltpu.MemorySpace.VMEM)
    logits_flat = pl.pallas_call(
        caption_kernel,
        out_shape=jax.ShapeDtypeStruct((B, T * V), jnp.float32),
        in_specs=[vmem() for _ in range(8)],
        out_specs=vmem(),
        scratch_shapes=[pltpu.VMEM(((T - 1) * B, H), jnp.float32)],
    )(
        image_vectors, fused["whcc0"], fused["bhcc0"], caps_tm,
        fused["g_table"], fused["w_block"], fused["wout"], fused["bout"],
    )
    # PyTorch returns [batch, word_i, n_tokens]; contiguous (free) reshape.
    return logits_flat.reshape(B, T, V)


# ----------------------------- pure-JAX reference ----------------------------
def caption_net_reference(image_vectors, captions_ix, params):
    B, T = captions_ix.shape
    H = params["wh0"].shape[1]
    V = params["wout"].shape[1]

    h0 = image_vectors @ params["wh0"] + params["bh0"][0]
    c0 = image_vectors @ params["wc0"] + params["bc0"][0]
    h = [h0, h0]
    c = [c0, c0]
    embs = params["emb"][captions_ix]  # [B, T, E]

    def cell(x, hp, cp, wih, whh, b):
        g = x @ wih + hp @ whh + b[0]
        i = jax.nn.sigmoid(g[:, 0 * H:1 * H])
        f = jax.nn.sigmoid(g[:, 1 * H:2 * H])
        gg = jnp.tanh(g[:, 2 * H:3 * H])
        o = jax.nn.sigmoid(g[:, 3 * H:4 * H])
        cn = f * cp + i * gg
        return o * jnp.tanh(cn), cn

    logits = [jnp.zeros((B, V), jnp.float32)]
    x = embs[:, 0]
    for t in range(1, T):
        h[0], c[0] = cell(x, h[0], c[0], params["wih0"], params["whh0"], params["b0"])
        h[1], c[1] = cell(h[0], h[1], c[1], params["wih1"], params["whh1"], params["b1"])
        logits.append(h[1] @ params["wout"] + params["bout"][0])
        x = embs[:, t]
    return jnp.stack(logits, axis=1)  # [B, T, V]


# ------------------------------------ main -----------------------------------
def init_params(key):
    ks = jax.random.split(key, 12)
    s = 0.05
    return {
        "wh0": s * jax.random.normal(ks[0], (CNN_FEAT, HIDDEN), jnp.float32),
        "bh0": s * jax.random.normal(ks[1], (1, HIDDEN), jnp.float32),
        "wc0": s * jax.random.normal(ks[2], (CNN_FEAT, HIDDEN), jnp.float32),
        "bc0": s * jax.random.normal(ks[3], (1, HIDDEN), jnp.float32),
        "emb": s * jax.random.normal(ks[4], (VOCAB, EMB_DIM), jnp.float32),
        "wih0": s * jax.random.normal(ks[5], (EMB_DIM, 4 * HIDDEN), jnp.float32),
        "whh0": s * jax.random.normal(ks[6], (HIDDEN, 4 * HIDDEN), jnp.float32),
        "b0": s * jax.random.normal(ks[7], (1, 4 * HIDDEN), jnp.float32),
        "wih1": s * jax.random.normal(ks[8], (HIDDEN, 4 * HIDDEN), jnp.float32),
        "whh1": s * jax.random.normal(ks[9], (HIDDEN, 4 * HIDDEN), jnp.float32),
        "b1": s * jax.random.normal(ks[10], (1, 4 * HIDDEN), jnp.float32),
        "wout": s * jax.random.normal(ks[11], (HIDDEN, VOCAB), jnp.float32),
        "bout": jnp.zeros((1, VOCAB), jnp.float32),
    }


if __name__ == "__main__":
    key = jax.random.PRNGKey(0)
    k_img, k_cap, k_par = jax.random.split(key, 3)

    image_vectors = jax.random.normal(k_img, (BATCH, CNN_FEAT), jnp.float32)
    captions_ix = jax.random.randint(k_cap, (BATCH, SEQ_LEN), 0, VOCAB, jnp.int32)
    params = init_params(k_par)

    # One-time parameter preparation (kept strictly separate from raw params to
    # avoid any double-scaling hazard).
    fused = prepare_caption_params(params)
    fused = jax.tree_util.tree_map(jax.block_until_ready, fused)

    logits = caption_net_forward(image_vectors, captions_ix, fused)
    logits = jax.block_until_ready(logits)

    ref = caption_net_reference(image_vectors, captions_ix, params)
    assert logits.shape == (BATCH, SEQ_LEN, VOCAB), logits.shape
    # tanh-via-sigmoid and fused/reordered matmuls change accumulation order
    # slightly; f32 still agrees to ~1e-6, 1e-4 tolerance is a comfortable margin.
    assert jnp.allclose(logits, ref, atol=1e-4, rtol=1e-4), (
        float(jnp.max(jnp.abs(logits - ref))))

    print("KERNEL_OK")
</pallas_src>

<mosaic_0001>
module attributes {stable_mosaic.version = 11 : i64} {
  func.func @caption_kernel(%arg0: memref<8x64xf32, #tpu.memory_space<vmem>>, %arg1: memref<64x128xf32, #tpu.memory_space<vmem>>, %arg2: memref<1x128xf32, #tpu.memory_space<vmem>>, %arg3: memref<64x1xi32, #tpu.memory_space<vmem>>, %arg4: memref<128x256xf32, #tpu.memory_space<vmem>>, %arg5: memref<64x256xf32, #tpu.memory_space<vmem>>, %arg6: memref<32x128xf32, #tpu.memory_space<vmem>>, %arg7: memref<1x128xf32, #tpu.memory_space<vmem>>, %arg8: memref<8x1024xf32, #tpu.memory_space<vmem>>, %arg9: memref<56x32xf32, #tpu.memory_space<vmem>>) attributes {dimension_semantics = [], scalar_prefetch = 0 : i64, scratch_operands = 1 : i64, tpu.core_type = #tpu.core_type<tc>} {
    %c0 = arith.constant 0 : index
    %c0_0 = arith.constant 0 : index
    %0 = vector.load %arg0[%c0, %c0_0] : memref<8x64xf32, #tpu.memory_space<vmem>>, vector<8x64xf32>
    %c0_1 = arith.constant 0 : index
    %c0_2 = arith.constant 0 : index
    %1 = vector.load %arg1[%c0_1, %c0_2] : memref<64x128xf32, #tpu.memory_space<vmem>>, vector<64x128xf32>
    %cst = arith.constant dense<0.000000e+00> : vector<8x128xf32>
    %2 = tpu.matmul %0, %1, %cst {dimension_numbers = #tpu.dot_dimension_numbers<[1], [0], [0], [1], [0, 0, 1, 1], [], []>} : vector<8x64xf32>, vector<64x128xf32>, vector<8x128xf32> -> vector<8x128xf32>
    %c0_3 = arith.constant 0 : index
    %c0_4 = arith.constant 0 : index
    %3 = vector.load %arg2[%c0_3, %c0_4] : memref<1x128xf32, #tpu.memory_space<vmem>>, vector<1x128xf32>
    %4 = vector.broadcast %3 : vector<1x128xf32> to vector<8x128xf32>
    %5 = arith.addf %2, %4 : vector<8x128xf32>
    %6 = vector.extract_strided_slice %5 {offsets = [0, 0], sizes = [8, 64], strides = [1, 1]} : vector<8x128xf32> to vector<8x64xf32>
    %7 = vector.extract_strided_slice %5 {offsets = [0, 64], sizes = [8, 64], strides = [1, 1]} : vector<8x128xf32> to vector<8x64xf32>
    %c0_5 = arith.constant 0 : index
    %c0_6 = arith.constant 0 : index
    %8 = vector.load %arg3[%c0_5, %c0_6] : memref<64x1xi32, #tpu.memory_space<vmem>>, vector<64x1xi32>
    %9 = tpu.iota {dimensions = array<i32: 1>} : vector<64x128xi32>
    %10 = vector.broadcast %8 : vector<64x1xi32> to vector<64x128xi32>
    %11 = arith.cmpi eq, %10, %9 : vector<64x128xi32>
    %cst_7 = arith.constant 1.000000e+00 : f32
    %cst_8 = arith.constant 0.000000e+00 : f32
    %12 = vector.broadcast %cst_7 : f32 to vector<64x128xf32>
    %13 = vector.broadcast %cst_8 : f32 to vector<64x128xf32>
    %14 = arith.select %11, %12, %13 : vector<64x128xi1>, vector<64x128xf32>
    %c0_9 = arith.constant 0 : index
    %c0_10 = arith.constant 0 : index
    %15 = vector.load %arg4[%c0_9, %c0_10] : memref<128x256xf32, #tpu.memory_space<vmem>>, vector<128x256xf32>
    %cst_11 = arith.constant dense<0.000000e+00> : vector<64x256xf32>
    %16 = tpu.matmul %14, %15, %cst_11 {dimension_numbers = #tpu.dot_dimension_numbers<[1], [0], [0], [1], [0, 0, 1, 1], [], []>} : vector<64x128xf32>, vector<128x256xf32>, vector<64x256xf32> -> vector<64x256xf32>
    %c0_12 = arith.constant 0 : index
    %c0_13 = arith.constant 0 : index
    %17 = vector.load %arg5[%c0_12, %c0_13] : memref<64x256xf32, #tpu.memory_space<vmem>>, vector<64x256xf32>
    %cst_14 = arith.constant dense<0.000000e+00> : vector<8x256xf32>
    %18 = tpu.matmul %6, %17, %cst_14 {dimension_numbers = #tpu.dot_dimension_numbers<[1], [0], [0], [1], [0, 0, 1, 1], [], []>} : vector<8x64xf32>, vector<64x256xf32>, vector<8x256xf32> -> vector<8x256xf32>
    %19 = vector.extract_strided_slice %16 {offsets = [0, 0], sizes = [8, 256], strides = [1, 1]} : vector<64x256xf32> to vector<8x256xf32>
    %20 = arith.addf %18, %19 : vector<8x256xf32>
    %21 = arith.negf %20 : vector<8x256xf32>
    %22 = math.exp %21 : vector<8x256xf32>
    %cst_15 = arith.constant 1.000000e+00 : f32
    %23 = vector.broadcast %cst_15 : f32 to vector<8x256xf32>
    %24 = arith.addf %23, %22 : vector<8x256xf32>
    %25 = arith.divf %23, %24 : vector<8x256xf32>
    %26 = vector.extract_strided_slice %25 {offsets = [0, 0], sizes = [8, 64], strides = [1, 1]} : vector<8x256xf32> to vector<8x64xf32>
    %27 = vector.extract_strided_slice %25 {offsets = [0, 64], sizes = [8, 64], strides = [1, 1]} : vector<8x256xf32> to vector<8x64xf32>
    %28 = vector.extract_strided_slice %25 {offsets = [0, 128], sizes = [8, 64], strides = [1, 1]} : vector<8x256xf32> to vector<8x64xf32>
    %cst_16 = arith.constant 2.000000e+00 : f32
    %29 = vector.broadcast %cst_16 : f32 to vector<8x64xf32>
    %30 = arith.mulf %29, %28 : vector<8x64xf32>
    %cst_17 = arith.constant 1.000000e+00 : f32
    %31 = vector.broadcast %cst_17 : f32 to vector<8x64xf32>
    %32 = arith.subf %30, %31 : vector<8x64xf32>
    %33 = vector.extract_strided_slice %25 {offsets = [0, 192], sizes = [8, 64], strides = [1, 1]} : vector<8x256xf32> to vector<8x64xf32>
    %34 = arith.mulf %27, %7 : vector<8x64xf32>
    %35 = arith.mulf %26, %32 : vector<8x64xf32>
    %36 = arith.addf %34, %35 : vector<8x64xf32>
    %37 = math.tanh %36 : vector<8x64xf32>
    %38 = arith.mulf %33, %37 : vector<8x64xf32>
    %39 = vector.extract_strided_slice %38 {offsets = [0, 0], sizes = [8, 32], strides = [1, 1]} : vector<8x64xf32> to vector<8x32xf32>
    %40 = vector.extract_strided_slice %6 {offsets = [0, 32], sizes = [8, 32], strides = [1, 1]} : vector<8x64xf32> to vector<8x32xf32>
    %41 = tpu.concatenate %39, %40 in 1 : vector<8x32xf32>, vector<8x32xf32> -> vector<8x64xf32>
    %42 = vector.extract_strided_slice %36 {offsets = [0, 0], sizes = [8, 32], strides = [1, 1]} : vector<8x64xf32> to vector<8x32xf32>
    %43 = vector.extract_strided_slice %7 {offsets = [0, 32], sizes = [8, 32], strides = [1, 1]} : vector<8x64xf32> to vector<8x32xf32>
    %44 = tpu.concatenate %42, %43 in 1 : vector<8x32xf32>, vector<8x32xf32> -> vector<8x64xf32>
    %cst_18 = arith.constant dense<0.000000e+00> : vector<8x256xf32>
    %45 = tpu.matmul %41, %17, %cst_18 {dimension_numbers = #tpu.dot_dimension_numbers<[1], [0], [0], [1], [0, 0, 1, 1], [], []>} : vector<8x64xf32>, vector<64x256xf32>, vector<8x256xf32> -> vector<8x256xf32>
    %46 = vector.extract_strided_slice %16 {offsets = [8, 0], sizes = [8, 256], strides = [1, 1]} : vector<64x256xf32> to vector<8x256xf32>
    %47 = arith.addf %45, %46 : vector<8x256xf32>
    %48 = arith.negf %47 : vector<8x256xf32>
    %49 = math.exp %48 : vector<8x256xf32>
    %cst_19 = arith.constant 1.000000e+00 : f32
    %50 = vector.broadcast %cst_19 : f32 to vector<8x256xf32>
    %51 = arith.addf %50, %49 : vector<8x256xf32>
    %52 = arith.divf %50, %51 : vector<8x256xf32>
    %53 = vector.extract_strided_slice %52 {offsets = [0, 0], sizes = [8, 64], strides = [1, 1]} : vector<8x256xf32> to vector<8x64xf32>
    %54 = vector.extract_strided_slice %52 {offsets = [0, 64], sizes = [8, 64], strides = [1, 1]} : vector<8x256xf32> to vector<8x64xf32>
    %55 = vector.extract_strided_slice %52 {offsets = [0, 128], sizes = [8, 64], strides = [1, 1]} : vector<8x256xf32> to vector<8x64xf32>
    %cst_20 = arith.constant 2.000000e+00 : f32
    %56 = vector.broadcast %cst_20 : f32 to vector<8x64xf32>
    %57 = arith.mulf %56, %55 : vector<8x64xf32>
    %cst_21 = arith.constant 1.000000e+00 : f32
    %58 = vector.broadcast %cst_21 : f32 to vector<8x64xf32>
    %59 = arith.subf %57, %58 : vector<8x64xf32>
    %60 = vector.extract_strided_slice %52 {offsets = [0, 192], sizes = [8, 64], strides = [1, 1]} : vector<8x256xf32> to vector<8x64xf32>
    %61 = arith.mulf %54, %44 : vector<8x64xf32>
    %62 = arith.mulf %53, %59 : vector<8x64xf32>
    %63 = arith.addf %61, %62 : vector<8x64xf32>
    %64 = math.tanh %63 : vector<8x64xf32>
    %65 = arith.mulf %60, %64 : vector<8x64xf32>
    %66 = vector.extract_strided_slice %65 {offsets = [0, 32], sizes = [8, 32], strides = [1, 1]} : vector<8x64xf32> to vector<8x32xf32>
    %c0_22 = arith.constant 0 : index
    %c0_23 = arith.constant 0 : index
    %67 = vector.load %arg9[%c0_22, %c0_23] : memref<56x32xf32, #tpu.memory_space<vmem>>, vector<8x32xf32>
    tpu.vector_store %arg9[%c0_22, %c0_23], %66 {strides = array<i32>} : memref<56x32xf32, #tpu.memory_space<vmem>>, vector<8x32xf32>,
    %cst_24 = arith.constant dense<0.000000e+00> : vector<8x256xf32>
    %68 = tpu.matmul %65, %17, %cst_24 {dimension_numbers = #tpu.dot_dimension_numbers<[1], [0], [0], [1], [0, 0, 1, 1], [], []>} : vector<8x64xf32>, vector<64x256xf32>, vector<8x256xf32> -> vector<8x256xf32>
    %69 = vector.extract_strided_slice %16 {offsets = [16, 0], sizes = [8, 256], strides = [1, 1]} : vector<64x256xf32> to vector<8x256xf32>
    %70 = arith.addf %68, %69 : vector<8x256xf32>
    %71 = arith.negf %70 : vector<8x256xf32>
    %72 = math.exp %71 : vector<8x256xf32>
    %cst_25 = arith.constant 1.000000e+00 : f32
    %73 = vector.broadcast %cst_25 : f32 to vector<8x256xf32>
    %74 = arith.addf %73, %72 : vector<8x256xf32>
    %75 = arith.divf %73, %74 : vector<8x256xf32>
    %76 = vector.extract_strided_slice %75 {offsets = [0, 0], sizes = [8, 64], strides = [1, 1]} : vector<8x256xf32> to vector<8x64xf32>
    %77 = vector.extract_strided_slice %75 {offsets = [0, 64], sizes = [8, 64], strides = [1, 1]} : vector<8x256xf32> to vector<8x64xf32>
    %78 = vector.extract_strided_slice %75 {offsets = [0, 128], sizes = [8, 64], strides = [1, 1]} : vector<8x256xf32> to vector<8x64xf32>
    %cst_26 = arith.constant 2.000000e+00 : f32
    %79 = vector.broadcast %cst_26 : f32 to vector<8x64xf32>
    %80 = arith.mulf %79, %78 : vector<8x64xf32>
    %cst_27 = arith.constant 1.000000e+00 : f32
    %81 = vector.broadcast %cst_27 : f32 to vector<8x64xf32>
    %82 = arith.subf %80, %81 : vector<8x64xf32>
    %83 = vector.extract_strided_slice %75 {offsets = [0, 192], sizes = [8, 64], strides = [1, 1]} : vector<8x256xf32> to vector<8x64xf32>
    %84 = arith.mulf %77, %63 : vector<8x64xf32>
    %85 = arith.mulf %76, %82 : vector<8x64xf32>
    %86 = arith.addf %84, %85 : vector<8x64xf32>
    %87 = math.tanh %86 : vector<8x64xf32>
    %88 = arith.mulf %83, %87 : vector<8x64xf32>
    %89 = vector.extract_strided_slice %88 {offsets = [0, 32], sizes = [8, 32], strides = [1, 1]} : vector<8x64xf32> to vector<8x32xf32>
    %c8 = arith.constant 8 : index
    %c0_28 = arith.constant 0 : index
    %90 = vector.load %arg9[%c8, %c0_28] : memref<56x32xf32, #tpu.memory_space<vmem>>, vector<8x32xf32>
    tpu.vector_store %arg9[%c8, %c0_28], %89 {strides = array<i32>} : memref<56x32xf32, #tpu.memory_space<vmem>>, vector<8x32xf32>,
    %cst_29 = arith.constant dense<0.000000e+00> : vector<8x256xf32>
    %91 = tpu.matmul %88, %17, %cst_29 {dimension_numbers = #tpu.dot_dimension_numbers<[1], [0], [0], [1], [0, 0, 1, 1], [], []>} : vector<8x64xf32>, vector<64x256xf32>, vector<8x256xf32> -> vector<8x256xf32>
    %92 = vector.extract_strided_slice %16 {offsets = [24, 0], sizes = [8, 256], strides = [1, 1]} : vector<64x256xf32> to vector<8x256xf32>
    %93 = arith.addf %91, %92 : vector<8x256xf32>
    %94 = arith.negf %93 : vector<8x256xf32>
    %95 = math.exp %94 : vector<8x256xf32>
    %cst_30 = arith.constant 1.000000e+00 : f32
    %96 = vector.broadcast %cst_30 : f32 to vector<8x256xf32>
    %97 = arith.addf %96, %95 : vector<8x256xf32>
    %98 = arith.divf %96, %97 : vector<8x256xf32>
    %99 = vector.extract_strided_slice %98 {offsets = [0, 0], sizes = [8, 64], strides = [1, 1]} : vector<8x256xf32> to vector<8x64xf32>
    %100 = vector.extract_strided_slice %98 {offsets = [0, 64], sizes = [8, 64], strides = [1, 1]} : vector<8x256xf32> to vector<8x64xf32>
    %101 = vector.extract_strided_slice %98 {offsets = [0, 128], sizes = [8, 64], strides = [1, 1]} : vector<8x256xf32> to vector<8x64xf32>
    %cst_31 = arith.constant 2.000000e+00 : f32
    %102 = vector.broadcast %cst_31 : f32 to vector<8x64xf32>
    %103 = arith.mulf %102, %101 : vector<8x64xf32>
    %cst_32 = arith.constant 1.000000e+00 : f32
    %104 = vector.broadcast %cst_32 : f32 to vector<8x64xf32>
    %105 = arith.subf %103, %104 : vector<8x64xf32>
    %106 = vector.extract_strided_slice %98 {offsets = [0, 192], sizes = [8, 64], strides = [1, 1]} : vector<8x256xf32> to vector<8x64xf32>
    %107 = arith.mulf %100, %86 : vector<8x64xf32>
    %108 = arith.mulf %99, %105 : vector<8x64xf32>
    %109 = arith.addf %107, %108 : vector<8x64xf32>
    %110 = math.tanh %109 : vector<8x64xf32>
    %111 = arith.mulf %106, %110 : vector<8x64xf32>
    %112 = vector.extract_strided_slice %111 {offsets = [0, 32], sizes = [8, 32], strides = [1, 1]} : vector<8x64xf32> to vector<8x32xf32>
    %c16 = arith.constant 16 : index
    %c0_33 = arith.constant 0 : index
    %113 = vector.load %arg9[%c16, %c0_33] : memref<56x32xf32, #tpu.memory_space<vmem>>, vector<8x32xf32>
    tpu.vector_store %arg9[%c16, %c0_33], %112 {strides = array<i32>} : memref<56x32xf32, #tpu.memory_space<vmem>>, vector<8x32xf32>,
    %cst_34 = arith.constant dense<0.000000e+00> : vector<8x256xf32>
    %114 = tpu.matmul %111, %17, %cst_34 {dimension_numbers = #tpu.dot_dimension_numbers<[1], [0], [0], [1], [0, 0, 1, 1], [], []>} : vector<8x64xf32>, vector<64x256xf32>, vector<8x256xf32> -> vector<8x256xf32>
    %115 = vector.extract_strided_slice %16 {offsets = [32, 0], sizes = [8, 256], strides = [1, 1]} : vector<64x256xf32> to vector<8x256xf32>
    %116 = arith.addf %114, %115 : vector<8x256xf32>
    %117 = arith.negf %116 : vector<8x256xf32>
    %118 = math.exp %117 : vector<8x256xf32>
    %cst_35 = arith.constant 1.000000e+00 : f32
    %119 = vector.broadcast %cst_35 : f32 to vector<8x256xf32>
    %120 = arith.addf %119, %118 : vector<8x256xf32>
    %121 = arith.divf %119, %120 : vector<8x256xf32>
    %122 = vector.extract_strided_slice %121 {offsets = [0, 0], sizes = [8, 64], strides = [1, 1]} : vector<8x256xf32> to vector<8x64xf32>
    %123 = vector.extract_strided_slice %121 {offsets = [0, 64], sizes = [8, 64], strides = [1, 1]} : vector<8x256xf32> to vector<8x64xf32>
    %124 = vector.extract_strided_slice %121 {offsets = [0, 128], sizes = [8, 64], strides = [1, 1]} : vector<8x256xf32> to vector<8x64xf32>
    %cst_36 = arith.constant 2.000000e+00 : f32
    %125 = vector.broadcast %cst_36 : f32 to vector<8x64xf32>
    %126 = arith.mulf %125, %124 : vector<8x64xf32>
    %cst_37 = arith.constant 1.000000e+00 : f32
    %127 = vector.broadcast %cst_37 : f32 to vector<8x64xf32>
    %128 = arith.subf %126, %127 : vector<8x64xf32>
    %129 = vector.extract_strided_slice %121 {offsets = [0, 192], sizes = [8, 64], strides = [1, 1]} : vector<8x256xf32> to vector<8x64xf32>
    %130 = arith.mulf %123, %109 : vector<8x64xf32>
    %131 = arith.mulf %122, %128 : vector<8x64xf32>
    %132 = arith.addf %130, %131 : vector<8x64xf32>
    %133 = math.tanh %132 : vector<8x64xf32>
    %134 = arith.mulf %129, %133 : vector<8x64xf32>
    %135 = vector.extract_strided_slice %134 {offsets = [0, 32], sizes = [8, 32], strides = [1, 1]} : vector<8x64xf32> to vector<8x32xf32>
    %c24 = arith.constant 24 : index
    %c0_38 = arith.constant 0 : index
    %136 = vector.load %arg9[%c24, %c0_38] : memref<56x32xf32, #tpu.memory_space<vmem>>, vector<8x32xf32>
    tpu.vector_store %arg9[%c24, %c0_38], %135 {strides = array<i32>} : memref<56x32xf32, #tpu.memory_space<vmem>>, vector<8x32xf32>,
    %cst_39 = arith.constant dense<0.000000e+00> : vector<8x256xf32>
    %137 = tpu.matmul %134, %17, %cst_39 {dimension_numbers = #tpu.dot_dimension_numbers<[1], [0], [0], [1], [0, 0, 1, 1], [], []>} : vector<8x64xf32>, vector<64x256xf32>, vector<8x256xf32> -> vector<8x256xf32>
    %138 = vector.extract_strided_slice %16 {offsets = [40, 0], sizes = [8, 256], strides = [1, 1]} : vector<64x256xf32> to vector<8x256xf32>
    %139 = arith.addf %137, %138 : vector<8x256xf32>
    %140 = arith.negf %139 : vector<8x256xf32>
    %141 = math.exp %140 : vector<8x256xf32>
    %cst_40 = arith.constant 1.000000e+00 : f32
    %142 = vector.broadcast %cst_40 : f32 to vector<8x256xf32>
    %143 = arith.addf %142, %141 : vector<8x256xf32>
    %144 = arith.divf %142, %143 : vector<8x256xf32>
    %145 = vector.extract_strided_slice %144 {offsets = [0, 0], sizes = [8, 64], strides = [1, 1]} : vector<8x256xf32> to vector<8x64xf32>
    %146 = vector.extract_strided_slice %144 {offsets = [0, 64], sizes = [8, 64], strides = [1, 1]} : vector<8x256xf32> to vector<8x64xf32>
    %147 = vector.extract_strided_slice %144 {offsets = [0, 128], sizes = [8, 64], strides = [1, 1]} : vector<8x256xf32> to vector<8x64xf32>
    %cst_41 = arith.constant 2.000000e+00 : f32
    %148 = vector.broadcast %cst_41 : f32 to vector<8x64xf32>
    %149 = arith.mulf %148, %147 : vector<8x64xf32>
    %cst_42 = arith.constant 1.000000e+00 : f32
    %150 = vector.broadcast %cst_42 : f32 to vector<8x64xf32>
    %151 = arith.subf %149, %150 : vector<8x64xf32>
    %152 = vector.extract_strided_slice %144 {offsets = [0, 192], sizes = [8, 64], strides = [1, 1]} : vector<8x256xf32> to vector<8x64xf32>
    %153 = arith.mulf %146, %132 : vector<8x64xf32>
    %154 = arith.mulf %145, %151 : vector<8x64xf32>
    %155 = arith.addf %153, %154 : vector<8x64xf32>
    %156 = math.tanh %155 : vector<8x64xf32>
    %157 = arith.mulf %152, %156 : vector<8x64xf32>
    %158 = vector.extract_strided_slice %157 {offsets = [0, 32], sizes = [8, 32], strides = [1, 1]} : vector<8x64xf32> to vector<8x32xf32>
    %c32 = arith.constant 32 : index
    %c0_43 = arith.constant 0 : index
    %159 = vector.load %arg9[%c32, %c0_43] : memref<56x32xf32, #tpu.memory_space<vmem>>, vector<8x32xf32>
    tpu.vector_store %arg9[%c32, %c0_43], %158 {strides = array<i32>} : memref<56x32xf32, #tpu.memory_space<vmem>>, vector<8x32xf32>,
    %cst_44 = arith.constant dense<0.000000e+00> : vector<8x256xf32>
    %160 = tpu.matmul %157, %17, %cst_44 {dimension_numbers = #tpu.dot_dimension_numbers<[1], [0], [0], [1], [0, 0, 1, 1], [], []>} : vector<8x64xf32>, vector<64x256xf32>, vector<8x256xf32> -> vector<8x256xf32>
    %161 = vector.extract_strided_slice %16 {offsets = [48, 0], sizes = [8, 256], strides = [1, 1]} : vector<64x256xf32> to vector<8x256xf32>
    %162 = arith.addf %160, %161 : vector<8x256xf32>
    %163 = arith.negf %162 : vector<8x256xf32>
    %164 = math.exp %163 : vector<8x256xf32>
    %cst_45 = arith.constant 1.000000e+00 : f32
    %165 = vector.broadcast %cst_45 : f32 to vector<8x256xf32>
    %166 = arith.addf %165, %164 : vector<8x256xf32>
    %167 = arith.divf %165, %166 : vector<8x256xf32>
    %168 = vector.extract_strided_slice %167 {offsets = [0, 0], sizes = [8, 64], strides = [1, 1]} : vector<8x256xf32> to vector<8x64xf32>
    %169 = vector.extract_strided_slice %167 {offsets = [0, 64], sizes = [8, 64], strides = [1, 1]} : vector<8x256xf32> to vector<8x64xf32>
    %170 = vector.extract_strided_slice %167 {offsets = [0, 128], sizes = [8, 64], strides = [1, 1]} : vector<8x256xf32> to vector<8x64xf32>
    %cst_46 = arith.constant 2.000000e+00 : f32
    %171 = vector.broadcast %cst_46 : f32 to vector<8x64xf32>
    %172 = arith.mulf %171, %170 : vector<8x64xf32>
    %cst_47 = arith.constant 1.000000e+00 : f32
    %173 = vector.broadcast %cst_47 : f32 to vector<8x64xf32>
    %174 = arith.subf %172, %173 : vector<8x64xf32>
    %175 = vector.extract_strided_slice %167 {offsets = [0, 192], sizes = [8, 64], strides = [1, 1]} : vector<8x256xf32> to vector<8x64xf32>
    %176 = arith.mulf %169, %155 : vector<8x64xf32>
    %177 = arith.mulf %168, %174 : vector<8x64xf32>
    %178 = arith.addf %176, %177 : vector<8x64xf32>
    %179 = math.tanh %178 : vector<8x64xf32>
    %180 = arith.mulf %175, %179 : vector<8x64xf32>
    %181 = vector.extract_strided_slice %180 {offsets = [0, 32], sizes = [8, 32], strides = [1, 1]} : vector<8x64xf32> to vector<8x32xf32>
    %c40 = arith.constant 40 : index
    %c0_48 = arith.constant 0 : index
    %182 = vector.load %arg9[%c40, %c0_48] : memref<56x32xf32, #tpu.memory_space<vmem>>, vector<8x32xf32>
    tpu.vector_store %arg9[%c40, %c0_48], %181 {strides = array<i32>} : memref<56x32xf32, #tpu.memory_space<vmem>>, vector<8x32xf32>,
    %cst_49 = arith.constant dense<0.000000e+00> : vector<8x256xf32>
    %183 = tpu.matmul %180, %17, %cst_49 {dimension_numbers = #tpu.dot_dimension_numbers<[1], [0], [0], [1], [0, 0, 1, 1], [], []>} : vector<8x64xf32>, vector<64x256xf32>, vector<8x256xf32> -> vector<8x256xf32>
    %184 = vector.extract_strided_slice %16 {offsets = [56, 0], sizes = [8, 256], strides = [1, 1]} : vector<64x256xf32> to vector<8x256xf32>
    %185 = arith.addf %183, %184 : vector<8x256xf32>
    %186 = arith.negf %185 : vector<8x256xf32>
    %187 = math.exp %186 : vector<8x256xf32>
    %cst_50 = arith.constant 1.000000e+00 : f32
    %188 = vector.broadcast %cst_50 : f32 to vector<8x256xf32>
    %189 = arith.addf %188, %187 : vector<8x256xf32>
    %190 = arith.divf %188, %189 : vector<8x256xf32>
    %191 = vector.extract_strided_slice %190 {offsets = [0, 0], sizes = [8, 64], strides = [1, 1]} : vector<8x256xf32> to vector<8x64xf32>
    %192 = vector.extract_strided_slice %190 {offsets = [0, 64], sizes = [8, 64], strides = [1, 1]} : vector<8x256xf32> to vector<8x64xf32>
    %193 = vector.extract_strided_slice %190 {offsets = [0, 128], sizes = [8, 64], strides = [1, 1]} : vector<8x256xf32> to vector<8x64xf32>
    %cst_51 = arith.constant 2.000000e+00 : f32
    %194 = vector.broadcast %cst_51 : f32 to vector<8x64xf32>
    %195 = arith.mulf %194, %193 : vector<8x64xf32>
    %cst_52 = arith.constant 1.000000e+00 : f32
    %196 = vector.broadcast %cst_52 : f32 to vector<8x64xf32>
    %197 = arith.subf %195, %196 : vector<8x64xf32>
    %198 = vector.extract_strided_slice %190 {offsets = [0, 192], sizes = [8, 64], strides = [1, 1]} : vector<8x256xf32> to vector<8x64xf32>
    %199 = arith.mulf %192, %178 : vector<8x64xf32>
    %200 = arith.mulf %191, %197 : vector<8x64xf32>
    %201 = arith.addf %199, %200 : vector<8x64xf32>
    %202 = math.tanh %201 : vector<8x64xf32>
    %203 = arith.mulf %198, %202 : vector<8x64xf32>
    %204 = vector.extract_strided_slice %203 {offsets = [0, 32], sizes = [8, 32], strides = [1, 1]} : vector<8x64xf32> to vector<8x32xf32>
    %c48 = arith.constant 48 : index
    %c0_53 = arith.constant 0 : index
    %205 = vector.load %arg9[%c48, %c0_53] : memref<56x32xf32, #tpu.memory_space<vmem>>, vector<8x32xf32>
    tpu.vector_store %arg9[%c48, %c0_53], %204 {strides = array<i32>} : memref<56x32xf32, #tpu.memory_space<vmem>>, vector<8x32xf32>,
    %c0_54 = arith.constant 0 : index
    %c0_55 = arith.constant 0 : index
    %206 = vector.load %arg9[%c0_54, %c0_55] : memref<56x32xf32, #tpu.memory_space<vmem>>, vector<56x32xf32>
    %c0_56 = arith.constant 0 : index
    %c0_57 = arith.constant 0 : index
    %207 = vector.load %arg6[%c0_56, %c0_57] : memref<32x128xf32, #tpu.memory_space<vmem>>, vector<32x128xf32>
    %cst_58 = arith.constant dense<0.000000e+00> : vector<56x128xf32>
    %208 = tpu.matmul %206, %207, %cst_58 {dimension_numbers = #tpu.dot_dimension_numbers<[1], [0], [0], [1], [0, 0, 1, 1], [], []>} : vector<56x32xf32>, vector<32x128xf32>, vector<56x128xf32> -> vector<56x128xf32>
    %c0_59 = arith.constant 0 : index
    %c0_60 = arith.constant 0 : index
    %209 = vector.load %arg7[%c0_59, %c0_60] : memref<1x128xf32, #tpu.memory_space<vmem>>, vector<1x128xf32>
    %210 = vector.broadcast %209 : vector<1x128xf32> to vector<56x128xf32>
    %211 = arith.addf %208, %210 : vector<56x128xf32>
    %cst_61 = arith.constant 0.000000e+00 : f32
    %212 = vector.broadcast %cst_61 : f32 to vector<8x128xf32>
    %c0_62 = arith.constant 0 : index
    %c0_63 = arith.constant 0 : index
    %213 = vector.load %arg8[%c0_62, %c0_63] : memref<8x1024xf32, #tpu.memory_space<vmem>>, vector<8x128xf32>
    tpu.vector_store %arg8[%c0_62, %c0_63], %212 {strides = array<i32>} : memref<8x1024xf32, #tpu.memory_space<vmem>>, vector<8x128xf32>,
    %214 = vector.extract_strided_slice %211 {offsets = [0, 0], sizes = [8, 128], strides = [1, 1]} : vector<56x128xf32> to vector<8x128xf32>
    %c0_64 = arith.constant 0 : index
    %c128 = arith.constant 128 : index
    %215 = vector.load %arg8[%c0_64, %c128] : memref<8x1024xf32, #tpu.memory_space<vmem>>, vector<8x128xf32>
    tpu.vector_store %arg8[%c0_64, %c128], %214 {strides = array<i32>} : memref<8x1024xf32, #tpu.memory_space<vmem>>, vector<8x128xf32>,
    %216 = vector.extract_strided_slice %211 {offsets = [8, 0], sizes = [8, 128], strides = [1, 1]} : vector<56x128xf32> to vector<8x128xf32>
    %c0_65 = arith.constant 0 : index
    %c256 = arith.constant 256 : index
    %217 = vector.load %arg8[%c0_65, %c256] : memref<8x1024xf32, #tpu.memory_space<vmem>>, vector<8x128xf32>
    tpu.vector_store %arg8[%c0_65, %c256], %216 {strides = array<i32>} : memref<8x1024xf32, #tpu.memory_space<vmem>>, vector<8x128xf32>,
    %218 = vector.extract_strided_slice %211 {offsets = [16, 0], sizes = [8, 128], strides = [1, 1]} : vector<56x128xf32> to vector<8x128xf32>
    %c0_66 = arith.constant 0 : index
    %c384 = arith.constant 384 : index
    %219 = vector.load %arg8[%c0_66, %c384] : memref<8x1024xf32, #tpu.memory_space<vmem>>, vector<8x128xf32>
    tpu.vector_store %arg8[%c0_66, %c384], %218 {strides = array<i32>} : memref<8x1024xf32, #tpu.memory_space<vmem>>, vector<8x128xf32>,
    %220 = vector.extract_strided_slice %211 {offsets = [24, 0], sizes = [8, 128], strides = [1, 1]} : vector<56x128xf32> to vector<8x128xf32>
    %c0_67 = arith.constant 0 : index
    %c512 = arith.constant 512 : index
    %221 = vector.load %arg8[%c0_67, %c512] : memref<8x1024xf32, #tpu.memory_space<vmem>>, vector<8x128xf32>
    tpu.vector_store %arg8[%c0_67, %c512], %220 {strides = array<i32>} : memref<8x1024xf32, #tpu.memory_space<vmem>>, vector<8x128xf32>,
    %222 = vector.extract_strided_slice %211 {offsets = [32, 0], sizes = [8, 128], strides = [1, 1]} : vector<56x128xf32> to vector<8x128xf32>
    %c0_68 = arith.constant 0 : index
    %c640 = arith.constant 640 : index
    %223 = vector.load %arg8[%c0_68, %c640] : memref<8x1024xf32, #tpu.memory_space<vmem>>, vector<8x128xf32>
    tpu.vector_store %arg8[%c0_68, %c640], %222 {strides = array<i32>} : memref<8x1024xf32, #tpu.memory_space<vmem>>, vector<8x128xf32>,
    %224 = vector.extract_strided_slice %211 {offsets = [40, 0], sizes = [8, 128], strides = [1, 1]} : vector<56x128xf32> to vector<8x128xf32>
    %c0_69 = arith.constant 0 : index
    %c768 = arith.constant 768 : index
    %225 = vector.load %arg8[%c0_69, %c768] : memref<8x1024xf32, #tpu.memory_space<vmem>>, vector<8x128xf32>
    tpu.vector_store %arg8[%c0_69, %c768], %224 {strides = array<i32>} : memref<8x1024xf32, #tpu.memory_space<vmem>>, vector<8x128xf32>,
    %226 = vector.extract_strided_slice %211 {offsets = [48, 0], sizes = [8, 128], strides = [1, 1]} : vector<56x128xf32> to vector<8x128xf32>
    %c0_70 = arith.constant 0 : index
    %c896 = arith.constant 896 : index
    %227 = vector.load %arg8[%c0_70, %c896] : memref<8x1024xf32, #tpu.memory_space<vmem>>, vector<8x128xf32>
    tpu.vector_store %arg8[%c0_70, %c896], %226 {strides = array<i32>} : memref<8x1024xf32, #tpu.memory_space<vmem>>, vector<8x128xf32>,
    return
  }
}

</mosaic_0001>

<llo_original>
// kernel: caption_net_forward.1
$region0: #{caption_net_forward.1}
  #allocation0 [shape = 'u32[]', space=smem, size = 0x4, offset = 0x4, fixed_abs, tag = 'smem constant byte address 0x4 - core index']
  #allocation1 [shape = 'u32[144,128]{1,0:T(1,128)}', space=vmem, size = 0x12000, scoped, tag = 'internal scratch']
  #allocation2 [shape = 'f32[56,32]{1,0:T(8,128)}', space=vmem, size = 0x7000, scoped, tag = 'scratch operand']
  %s0 = inlined_call_operand.hbm [shape: f32[8,64], index: 0, kind: input, shape index: {}]
  %s1 = inlined_call_operand.vmem [shape: f32[64,128], index: 1, kind: input, shape index: {}]
  %s2 = inlined_call_operand.vmem [shape: f32[1,128], index: 2, kind: input, shape index: {}]
  %s3 = inlined_call_operand.vmem [shape: s32[64,1], index: 3, kind: input, shape index: {}]
  %s4 = inlined_call_operand.hbm [shape: f32[128,256], index: 4, kind: input, shape index: {}]
  %s5 = inlined_call_operand.hbm [shape: f32[64,256], index: 5, kind: input, shape index: {}]
  %s6 = inlined_call_operand.vmem [shape: f32[32,128], index: 6, kind: input, shape index: {}]
  %s7 = inlined_call_operand.vmem [shape: f32[1,128], index: 7, kind: input, shape index: {}]
  %s8 = inlined_call_operand.vmem [shape: f32[8,1024], index: 8, kind: output, shape index: {}]
  %s9 = sld [smem:[#allocation0]]
  $region54: #{caption_net_forward.1} parent=0
    _
  %s11 = ssub.s32 1, %s9
  %s12 = scalar_select 0, %s11, %s9
  $region1: #{caption_net_forward.1} parent=0
    #allocation3 [shape = 'u8[4096]{0}', space=vmem, size = 0x1000, scoped, tag = 'input window, operand 0, single buffered']
    #allocation4 [shape = 's32[1]{0}', space=sflag, size = 0x4, scoped, tag = 'scoped memory for caption_net_forward.1']
    #allocation5 [shape = 'u8[131072]{0}', space=vmem, size = 0x20000, scoped, tag = 'input window, operand 4, single buffered']
    #allocation6 [shape = 's32[1]{0}', space=sflag, size = 0x4, scoped, tag = 'scoped memory for caption_net_forward.1']
    #allocation7 [shape = 'u8[65536]{0}', space=vmem, size = 0x10000, scoped, tag = 'input window, operand 5, single buffered']
    %13 = vsyncpa [#allocation4], 0
    %14 = vsyncpa [#allocation6], 0
    // Predicated region
    $region2: #{caption_net_forward.1} parent=1 // pred_check
      _
    $region3: #{caption_net_forward.1} parent=1 // pred_check_branch
      %16 = sbr.rel (0) target = $region5
    $region4: #{caption_net_forward.1} parent=1 // pred_region
      %s18 = ssub.s32 128, 128
      %19 = vsyncadd [#allocation4], %s18
      %s21 = sshll.u32 [#allocation3], 4
      %s22 = int_to_ptr.vmem [resolvable:$true] %s21
      %24 = dma.hbm_to_vmem [thread:$0]  %s0, 128, %s22, [#allocation4]
    $region5: #{caption_net_forward.1} parent=1 // pred_fallthru
      _
    // Predicated region
    $region6: #{caption_net_forward.1} parent=1 // pred_check
      _
    $region7: #{caption_net_forward.1} parent=1 // pred_check_branch
      %26 = sbr.rel (0) target = $region9
    $region8: #{caption_net_forward.1} parent=1 // pred_region
      _
    $region9: #{caption_net_forward.1} parent=1 // pred_fallthru
      _
    // Predicated region
    $region10: #{caption_net_forward.1} parent=1 // pred_check
      _
    $region11: #{caption_net_forward.1} parent=1 // pred_check_branch
      %28 = sbr.rel (0) target = $region13
    $region12: #{caption_net_forward.1} parent=1 // pred_region
      _
    $region13: #{caption_net_forward.1} parent=1 // pred_fallthru
      _
    // Predicated region
    $region14: #{caption_net_forward.1} parent=1 // pred_check
      _
    $region15: #{caption_net_forward.1} parent=1 // pred_check_branch
      %30 = sbr.rel (0) target = $region17
    $region16: #{caption_net_forward.1} parent=1 // pred_region
      _
    $region17: #{caption_net_forward.1} parent=1 // pred_fallthru
      _
    // Predicated region
    $region18: #{caption_net_forward.1} parent=1 // pred_check
      _
    $region19: #{caption_net_forward.1} parent=1 // pred_check_branch
      %32 = sbr.rel (0) target = $region21
    $region20: #{caption_net_forward.1} parent=1 // pred_region
      %s34 = ssub.s32 4096, 4096
      %35 = vsyncadd [#allocation6], %s34
      %s36 = sshll.u32 [#allocation5], 4
      %s37 = int_to_ptr.vmem [resolvable:$true] %s36
      %42 = dma.hbm_to_vmem [thread:$0]  %s4, 4096, %s37, [#allocation6], 256, 256, 16
    $region21: #{caption_net_forward.1} parent=1 // pred_fallthru
      _
    // Predicated region
    $region22: #{caption_net_forward.1} parent=1 // pred_check
      _
    $region23: #{caption_net_forward.1} parent=1 // pred_check_branch
      %44 = sbr.rel (0) target = $region25
    $region24: #{caption_net_forward.1} parent=1 // pred_region
      %s46 = ssub.s32 2048, 2048
      %47 = vsyncadd [#allocation6], %s46
      %s48 = sshll.u32 [#allocation7], 4
      %s49 = int_to_ptr.vmem [resolvable:$true] %s48
      %54 = dma.hbm_to_vmem [thread:$0]  %s5, 2048, %s49, [#allocation6], 256, 256, 16
    $region25: #{caption_net_forward.1} parent=1 // pred_fallthru
      _
    // Predicated region
    $region26: #{caption_net_forward.1} parent=1 // pred_check
      _
    $region27: #{caption_net_forward.1} parent=1 // pred_check_branch
      %56 = sbr.rel (0) target = $region29
    $region28: #{caption_net_forward.1} parent=1 // pred_region
      _
    $region29: #{caption_net_forward.1} parent=1 // pred_fallthru
      _
    // Predicated region
    $region30: #{caption_net_forward.1} parent=1 // pred_check
      _
    $region31: #{caption_net_forward.1} parent=1 // pred_check_branch
      %58 = sbr.rel (0) target = $region33
    $region32: #{caption_net_forward.1} parent=1 // pred_region
      _
    $region33: #{caption_net_forward.1} parent=1 // pred_fallthru
      _
    // Predicated region
    $region34: #{caption_net_forward.1} parent=1 // pred_check
      _
    $region35: #{caption_net_forward.1} parent=1 // pred_check_branch
      %60 = sbr.rel (0) target = $region37
    $region36: #{caption_net_forward.1} parent=1 // pred_region
      %61 = dma.done [#allocation4], 128
    $region37: #{caption_net_forward.1} parent=1 // pred_fallthru
      _
    // Predicated region
    $region38: #{caption_net_forward.1} parent=1 // pred_check
      _
    $region39: #{caption_net_forward.1} parent=1 // pred_check_branch
      %63 = sbr.rel (0) target = $region41
    $region40: #{caption_net_forward.1} parent=1 // pred_region
      %64 = dma.done [#allocation6], 4096
    $region41: #{caption_net_forward.1} parent=1 // pred_fallthru
      _
    // Predicated region
    $region42: #{caption_net_forward.1} parent=1 // pred_check
      _
    $region43: #{caption_net_forward.1} parent=1 // pred_check_branch
      %66 = sbr.rel (0) target = $region45
    $region44: #{caption_net_forward.1} parent=1 // pred_region
      %67 = dma.done [#allocation6], 2048
    $region45: #{caption_net_forward.1} parent=1 // pred_fallthru
      _
    %v68 = vld [vmem:[#allocation3] sm:$0xff]
    %v69 = vld [vmem:[%s1] sm:$0xff]
    %v70 = vld [vmem:[%s1 + $0x8] sm:$0xff]
    %v71 = vld [vmem:[%s1 + $0x10] sm:$0xff]
    %v72 = vld [vmem:[%s1 + $0x18] sm:$0xff]
    %v73 = vld [vmem:[%s1 + $0x20] sm:$0xff]
    %v74 = vld [vmem:[%s1 + $0x28] sm:$0xff]
    %v75 = vld [vmem:[%s1 + $0x30] sm:$0xff]
    %v76 = vld [vmem:[%s1 + $0x38] sm:$0xff]
    %v77 = vld [vmem:[%s2] sm:$0x1]
    %v79 = vlaneseq
    %v80 = vshrl.u32 %v79, 7
    %v81 = vsub.s32 0, %v80
    %v82 = vrot.slane %v77, %v81
    %vm84 = vcmask 523264
    %v86 = vsel %vm84, %v68, 0
    %88 = vmatprep.subr.mxu0 0.0
    %89 = vmatpush1.msra.mxu0 0.0
    %90 = vmatprep.subr.mxu0 0.0
    %91 = vmatpush1.msra.mxu0 0.0
    %92 = vmatprep.subr.mxu0 0.0
    %93 = vmatpush1.msra.mxu0 0.0
    %94 = vmatprep.subr.mxu0 0.0
    %95 = vmatpush1.msra.mxu0 0.0
    %96 = vmatprep.subr.mxu0 0.0
    %97 = vmatpush1.msra.mxu0 0.0
    %98 = vmatprep.subr.mxu0 0.0
    %99 = vmatpush1.msra.mxu0 0.0
    %100 = vmatprep.subr.mxu0 0.0
    %101 = vmatpush1.msra.mxu0 0.0
    %102 = vmatprep.subr.mxu0 0.0
    %103 = vmatpush1.msra.mxu0 0.0
    %104 = vmatprep.subr.mxu0 0.0
    %105 = vmatpush1.msra.mxu0 %v76
    %106 = vmatprep.subr.mxu0 0.0
    %107 = vmatpush1.msra.mxu0 %v75
    %108 = vmatprep.subr.mxu0 0.0
    %109 = vmatpush1.msra.mxu0 %v74
    %110 = vmatprep.subr.mxu0 0.0
    %111 = vmatpush1.msra.mxu0 %v73
    %112 = vmatprep.subr.mxu0 0.0
    %113 = vmatpush1.msra.mxu0 %v72
    %114 = vmatprep.subr.mxu0 0.0
    %115 = vmatpush1.msra.mxu0 %v71
    %116 = vmatprep.subr.mxu0 0.0
    %117 = vmatpush1.msra.mxu0 %v70
    %118 = vmatprep.subr.mxu0 0.0
    %119 = vmatpush1.msra.mxu0 %v69
    %120 = vmatprep.subr.mxu0 0.0
    %121 = vmatpush2.msra.mxu0 0.0
    %122 = vmatprep.subr.mxu0 0.0
    %123 = vmatpush2.msra.mxu0 0.0
    %124 = vmatprep.subr.mxu0 0.0
    %125 = vmatpush2.msra.mxu0 0.0
    %126 = vmatprep.subr.mxu0 0.0
    %127 = vmatpush2.msra.mxu0 0.0
    %128 = vmatprep.subr.mxu0 0.0
    %129 = vmatpush2.msra.mxu0 0.0
    %130 = vmatprep.subr.mxu0 0.0
    %131 = vmatpush2.msra.mxu0 0.0
    %132 = vmatprep.subr.mxu0 0.0
    %133 = vmatpush2.msra.mxu0 0.0
    %134 = vmatprep.subr.mxu0 0.0
    %135 = vmatpush2.msra.mxu0 0.0
    %136 = vmatprep.subr.mxu0 0.0
    %137 = vmatpush2.msra.mxu0 0.0
    %138 = vmatprep.subr.mxu0 0.0
    %139 = vmatpush2.msra.mxu0 0.0
    %140 = vmatprep.subr.mxu0 0.0
    %141 = vmatpush2.msra.mxu0 0.0
    %142 = vmatprep.subr.mxu0 0.0
    %143 = vmatpush2.msra.mxu0 0.0
    %144 = vmatprep.subr.mxu0 0.0
    %145 = vmatpush2.msra.mxu0 0.0
    %146 = vmatprep.subr.mxu0 0.0
    %147 = vmatpush2.msra.mxu0 0.0
    %148 = vmatprep.subr.mxu0 0.0
    %149 = vmatpush2.msra.mxu0 0.0
    %150 = vmatprep.subr.mxu0 0.0
    %151 = vmatpush2.msra.mxu0 0.0
    %152 = vmatprep.mubr.f32.mxu0 0.0
    %153 = vmatmul.mubr.f32.gmra.mxu0 %v86
    %v154 = vpop.f32.mrf.mxu0
    %v155 = vadd.f32 %v82, %v154
    %v156 = vpop.f32.mrf.mxu0
    %157 = vdwg.mxu0
    %v158 = vld [vmem:[%s3] sm:$0xff]
    %v159 = vld [vmem:[%s3 + $0x8] sm:$0xff]
    %v160 = vld [vmem:[%s3 + $0x10] sm:$0xff]
    %v161 = vld [vmem:[%s3 + $0x18] sm:$0xff]
    %v162 = vld [vmem:[%s3 + $0x20] sm:$0xff]
    %v163 = vld [vmem:[%s3 + $0x28] sm:$0xff]
    %v164 = vld [vmem:[%s3 + $0x30] sm:$0xff]
    %v165 = vld [vmem:[%s3 + $0x38] sm:$0xff]
    %v166 = vlaneseq
    %v167 = vand.u32 %v166, 127
    %168 = vset.pattern.permute.xlu0 0
    %169 = vperm.xlu0 %168, %v158
    %v170 = vpop.permute.xlu0 %169
    %171 = vset.pattern.permute.xlu0 0
    %172 = vperm.xlu0 %171, %v159
    %v173 = vpop.permute.xlu0 %172
    %174 = vset.pattern.permute.xlu0 0
    %175 = vperm.xlu0 %174, %v160
    %v176 = vpop.permute.xlu0 %175
    %177 = vset.pattern.permute.xlu0 0
    %178 = vperm.xlu0 %177, %v161
    %v179 = vpop.permute.xlu0 %178
    %180 = vset.pattern.permute.xlu0 0
    %181 = vperm.xlu0 %180, %v162
    %v182 = vpop.permute.xlu0 %181
    %183 = vset.pattern.permute.xlu0 0
    %184 = vperm.xlu0 %183, %v163
    %v185 = vpop.permute.xlu0 %184
    %186 = vset.pattern.permute.xlu0 0
    %187 = vperm.xlu0 %186, %v164
    %v188 = vpop.permute.xlu0 %187
    %189 = vset.pattern.permute.xlu0 0
    %190 = vperm.xlu0 %189, %v165
    %v191 = vpop.permute.xlu0 %190
    %vm192 = vcmp.eq.s32.totalorder %v170, %v167
    %vm193 = vcmp.eq.s32.totalorder %v173, %v167
    %vm194 = vcmp.eq.s32.totalorder %v176, %v167
    %vm195 = vcmp.eq.s32.totalorder %v179, %v167
    %vm196 = vcmp.eq.s32.totalorder %v182, %v167
    %vm197 = vcmp.eq.s32.totalorder %v185, %v167
    %vm198 = vcmp.eq.s32.totalorder %v188, %v167
    %vm199 = vcmp.eq.s32.totalorder %v191, %v167
    %v200 = vsel %vm192, 1.0, 0.0
    %v201 = vsel %vm193, 1.0, 0.0
    %v202 = vsel %vm194, 1.0, 0.0
    %v203 = vsel %vm195, 1.0, 0.0
    %v204 = vsel %vm196, 1.0, 0.0
    %v205 = vsel %vm197, 1.0, 0.0
    %v206 = vsel %vm198, 1.0, 0.0
    %v207 = vsel %vm199, 1.0, 0.0
    %v208 = vld [vmem:[#allocation5] sm:$0xff]
    %v209 = vld [vmem:[#allocation5 + $0x8] sm:$0xff]
    %v210 = vld [vmem:[#allocation5 + $0x10] sm:$0xff]
    %v211 = vld [vmem:[#allocation5 + $0x18] sm:$0xff]
    %v212 = vld [vmem:[#allocation5 + $0x20] sm:$0xff]
    %v213 = vld [vmem:[#allocation5 + $0x28] sm:$0xff]
    %v214 = vld [vmem:[#allocation5 + $0x30] sm:$0xff]
    %v215 = vld [vmem:[#allocation5 + $0x38] sm:$0xff]
    %v216 = vld [vmem:[#allocation5 + $0x40] sm:$0xff]
    %v217 = vld [vmem:[#allocation5 + $0x48] sm:$0xff]
    %v218 = vld [vmem:[#allocation5 + $0x50] sm:$0xff]
    %v219 = vld [vmem:[#allocation5 + $0x58] sm:$0xff]
    %v220 = vld [vmem:[#allocation5 + $0x60] sm:$0xff]
    %v221 = vld [vmem:[#allocation5 + $0x68] sm:$0xff]
    %v222 = vld [vmem:[#allocation5 + $0x70] sm:$0xff]
    %v223 = vld [vmem:[#allocation5 + $0x78] sm:$0xff]
    %v224 = vld [vmem:[#allocation5 + $0x80] sm:$0xff]
    %v225 = vld [vmem:[#allocation5 + $0x88] sm:$0xff]
    %v226 = vld [vmem:[#allocation5 + $0x90] sm:$0xff]
    %v227 = vld [vmem:[#allocation5 + $0x98] sm:$0xff]
    %v228 = vld [vmem:[#allocation5 + $0xa0] sm:$0xff]
    %v229 = vld [vmem:[#allocation5 + $0xa8] sm:$0xff]
    %v230 = vld [vmem:[#allocation5 + $0xb0] sm:$0xff]
    %v231 = vld [vmem:[#allocation5 + $0xb8] sm:$0xff]
    %v232 = vld [vmem:[#allocation5 + $0xc0] sm:$0xff]
    %v233 = vld [vmem:[#allocation5 + $0xc8] sm:$0xff]
    %v234 = vld [vmem:[#allocation5 + $0xd0] sm:$0xff]
    %v235 = vld [vmem:[#allocation5 + $0xd8] sm:$0xff]
    %v236 = vld [vmem:[#allocation5 + $0xe0] sm:$0xff]
    %v237 = vld [vmem:[#allocation5 + $0xe8] sm:$0xff]
    %v238 = vld [vmem:[#allocation5 + $0xf0] sm:$0xff]
    %v239 = vld [vmem:[#allocation5 + $0xf8] sm:$0xff]
    %240 = vmatprep.subr.mxu0 %v239
    %241 = vmatpush1.msra.mxu0 %v238
    %242 = vmatprep.subr.mxu0 %v237
    %243 = vmatpush1.msra.mxu0 %v236
    %244 = vmatprep.subr.mxu0 %v235
    %245 = vmatpush1.msra.mxu0 %v234
    %246 = vmatprep.subr.mxu0 %v233
    %247 = vmatpush1.msra.mxu0 %v232
    %248 = vmatprep.subr.mxu0 %v231
    %249 = vmatpush1.msra.mxu0 %v230
    %250 = vmatprep.subr.mxu0 %v229
    %251 = vmatpush1.msra.mxu0 %v228
    %252 = vmatprep.subr.mxu0 %v227
    %253 = vmatpush1.msra.mxu0 %v226
    %254 = vmatprep.subr.mxu0 %v225
    %255 = vmatpush1.msra.mxu0 %v224
    %256 = vmatprep.subr.mxu0 %v223
    %257 = vmatpush1.msra.mxu0 %v222
    %258 = vmatprep.subr.mxu0 %v221
    %259 = vmatpush1.msra.mxu0 %v220
    %260 = vmatprep.subr.mxu0 %v219
    %261 = vmatpush1.msra.mxu0 %v218
    %262 = vmatprep.subr.mxu0 %v217
    %263 = vmatpush1.msra.mxu0 %v216
    %264 = vmatprep.subr.mxu0 %v215
    %265 = vmatpush1.msra.mxu0 %v214
    %266 = vmatprep.subr.mxu0 %v213
    %267 = vmatpush1.msra.mxu0 %v212
    %268 = vmatprep.subr.mxu0 %v211
    %269 = vmatpush1.msra.mxu0 %v210
    %270 = vmatprep.subr.mxu0 %v209
    %271 = vmatpush1.msra.mxu0 %v208
    %272 = vmatprep.subr.mxu0 0.0
    %273 = vmatpush2.msra.mxu0 0.0
    %274 = vmatprep.subr.mxu0 0.0
    %275 = vmatpush2.msra.mxu0 0.0
    %276 = vmatprep.subr.mxu0 0.0
    %277 = vmatpush2.msra.mxu0 0.0
    %278 = vmatprep.subr.mxu0 0.0
    %279 = vmatpush2.msra.mxu0 0.0
    %280 = vmatprep.subr.mxu0 0.0
    %281 = vmatpush2.msra.mxu0 0.0
    %282 = vmatprep.subr.mxu0 0.0
    %283 = vmatpush2.msra.mxu0 0.0
    %284 = vmatprep.subr.mxu0 0.0
    %285 = vmatpush2.msra.mxu0 0.0
    %286 = vmatprep.subr.mxu0 0.0
    %287 = vmatpush2.msra.mxu0 0.0
    %288 = vmatprep.subr.mxu0 0.0
    %289 = vmatpush2.msra.mxu0 0.0
    %290 = vmatprep.subr.mxu0 0.0
    %291 = vmatpush2.msra.mxu0 0.0
    %292 = vmatprep.subr.mxu0 0.0
    %293 = vmatpush2.msra.mxu0 0.0
    %294 = vmatprep.subr.mxu0 0.0
    %295 = vmatpush2.msra.mxu0 0.0
    %296 = vmatprep.subr.mxu0 0.0
    %297 = vmatpush2.msra.mxu0 0.0
    %298 = vmatprep.subr.mxu0 0.0
    %299 = vmatpush2.msra.mxu0 0.0
    %300 = vmatprep.subr.mxu0 0.0
    %301 = vmatpush2.msra.mxu0 0.0
    %302 = vmatprep.subr.mxu0 0.0
    %303 = vmatpush2.msra.mxu0 0.0
    %304 = vmatprep.mubr.f32.mxu0 0.0
    %305 = vmatmul.mubr.f32.gmra.mxu0 %v200
    %v306 = vpop.f32.mrf.mxu0
    %v307 = vadd.f32 0.0, %v306
    %v308 = vpop.f32.mrf.mxu0
    %v309 = vadd.f32 0.0, %v308
    %310 = vmatprep.mubr.f32.mxu0 0.0
    %311 = vmatmul.mubr.f32.gmra.mxu0 %v201
    %v312 = vpop.f32.mrf.mxu0
    %v313 = vadd.f32 0.0, %v312
    %v314 = vpop.f32.mrf.mxu0
    %v315 = vadd.f32 0.0, %v314
    %316 = vmatprep.mubr.f32.mxu0 0.0
    %317 = vmatmul.mubr.f32.gmra.mxu0 %v202
    %v318 = vpop.f32.mrf.mxu0
    %v319 = vadd.f32 0.0, %v318
    %v320 = vpop.f32.mrf.mxu0
    %v321 = vadd.f32 0.0, %v320
    %322 = vmatprep.mubr.f32.mxu0 0.0
    %323 = vmatmul.mubr.f32.gmra.mxu0 %v203
    %v324 = vpop.f32.mrf.mxu0
    %v325 = vadd.f32 0.0, %v324
    %v326 = vpop.f32.mrf.mxu0
    %v327 = vadd.f32 0.0, %v326
    %328 = vmatprep.mubr.f32.mxu0 0.0
    %329 = vmatmul.mubr.f32.gmra.mxu0 %v204
    %v330 = vpop.f32.mrf.mxu0
    %v331 = vadd.f32 0.0, %v330
    %v332 = vpop.f32.mrf.mxu0
    %v333 = vadd.f32 0.0, %v332
    %334 = vmatprep.mubr.f32.mxu0 0.0
    %335 = vmatmul.mubr.f32.gmra.mxu0 %v205
    %v336 = vpop.f32.mrf.mxu0
    %v337 = vadd.f32 0.0, %v336
    %v338 = vpop.f32.mrf.mxu0
    %v339 = vadd.f32 0.0, %v338
    %340 = vmatprep.mubr.f32.mxu0 0.0
    %341 = vmatmul.mubr.f32.gmra.mxu0 %v206
    %v342 = vpop.f32.mrf.mxu0
    %v343 = vadd.f32 0.0, %v342
    %v344 = vpop.f32.mrf.mxu0
    %v345 = vadd.f32 0.0, %v344
    %346 = vmatprep.mubr.f32.mxu0 0.0
    %347 = vmatmul.mubr.f32.gmra.mxu0 %v207
    %v348 = vpop.f32.mrf.mxu0
    %v349 = vadd.f32 0.0, %v348
    %v350 = vpop.f32.mrf.mxu0
    %v351 = vadd.f32 0.0, %v350
    %352 = vdwg.mxu0
    %v353 = vld [vmem:[#allocation7] sm:$0xff]
    %v354 = vld [vmem:[#allocation7 + $0x8] sm:$0xff]
    %v355 = vld [vmem:[#allocation7 + $0x10] sm:$0xff]
    %v356 = vld [vmem:[#allocation7 + $0x18] sm:$0xff]
    %v357 = vld [vmem:[#allocation7 + $0x20] sm:$0xff]
    %v358 = vld [vmem:[#allocation7 + $0x28] sm:$0xff]
    %v359 = vld [vmem:[#allocation7 + $0x30] sm:$0xff]
    %v360 = vld [vmem:[#allocation7 + $0x38] sm:$0xff]
    %v361 = vld [vmem:[#allocation7 + $0x40] sm:$0xff]
    %v362 = vld [vmem:[#allocation7 + $0x48] sm:$0xff]
    %v363 = vld [vmem:[#allocation7 + $0x50] sm:$0xff]
    %v364 = vld [vmem:[#allocation7 + $0x58] sm:$0xff]
    %v365 = vld [vmem:[#allocation7 + $0x60] sm:$0xff]
    %v366 = vld [vmem:[#allocation7 + $0x68] sm:$0xff]
    %v367 = vld [vmem:[#allocation7 + $0x70] sm:$0xff]
    %v368 = vld [vmem:[#allocation7 + $0x78] sm:$0xff]
    %v370 = vsel %vm84, %v155, 0
    %372 = vmatprep.subr.mxu0 0.0
    %373 = vmatpush1.msra.mxu0 0.0
    %374 = vmatprep.subr.mxu0 0.0
    %375 = vmatpush1.msra.mxu0 0.0
    %376 = vmatprep.subr.mxu0 0.0
    %377 = vmatpush1.msra.mxu0 0.0
    %378 = vmatprep.subr.mxu0 0.0
    %379 = vmatpush1.msra.mxu0 0.0
    %380 = vmatprep.subr.mxu0 0.0
    %381 = vmatpush1.msra.mxu0 0.0
    %382 = vmatprep.subr.mxu0 0.0
    %383 = vmatpush1.msra.mxu0 0.0
    %384 = vmatprep.subr.mxu0 0.0
    %385 = vmatpush1.msra.mxu0 0.0
    %386 = vmatprep.subr.mxu0 0.0
    %387 = vmatpush1.msra.mxu0 0.0
    %388 = vmatprep.subr.mxu0 %v368
    %389 = vmatpush1.msra.mxu0 %v367
    %390 = vmatprep.subr.mxu0 %v366
    %391 = vmatpush1.msra.mxu0 %v365
    %392 = vmatprep.subr.mxu0 %v364
    %393 = vmatpush1.msra.mxu0 %v363
    %394 = vmatprep.subr.mxu0 %v362
    %395 = vmatpush1.msra.mxu0 %v361
    %396 = vmatprep.subr.mxu0 %v360
    %397 = vmatpush1.msra.mxu0 %v359
    %398 = vmatprep.subr.mxu0 %v358
    %399 = vmatpush1.msra.mxu0 %v357
    %400 = vmatprep.subr.mxu0 %v356
    %401 = vmatpush1.msra.mxu0 %v355
    %402 = vmatprep.subr.mxu0 %v354
    %403 = vmatpush1.msra.mxu0 %v353
    %404 = vmatprep.subr.mxu0 0.0
    %405 = vmatpush2.msra.mxu0 0.0
    %406 = vmatprep.subr.mxu0 0.0
    %407 = vmatpush2.msra.mxu0 0.0
    %408 = vmatprep.subr.mxu0 0.0
    %409 = vmatpush2.msra.mxu0 0.0
    %410 = vmatprep.subr.mxu0 0.0
    %411 = vmatpush2.msra.mxu0 0.0
    %412 = vmatprep.subr.mxu0 0.0
    %413 = vmatpush2.msra.mxu0 0.0
    %414 = vmatprep.subr.mxu0 0.0
    %415 = vmatpush2.msra.mxu0 0.0
    %416 = vmatprep.subr.mxu0 0.0
    %417 = vmatpush2.msra.mxu0 0.0
    %418 = vmatprep.subr.mxu0 0.0
    %419 = vmatpush2.msra.mxu0 0.0
    %420 = vmatprep.subr.mxu0 0.0
    %421 = vmatpush2.msra.mxu0 0.0
    %422 = vmatprep.subr.mxu0 0.0
    %423 = vmatpush2.msra.mxu0 0.0
    %424 = vmatprep.subr.mxu0 0.0
    %425 = vmatpush2.msra.mxu0 0.0
    %426 = vmatprep.subr.mxu0 0.0
    %427 = vmatpush2.msra.mxu0 0.0
    %428 = vmatprep.subr.mxu0 0.0
    %429 = vmatpush2.msra.mxu0 0.0
    %430 = vmatprep.subr.mxu0 0.0
    %431 = vmatpush2.msra.mxu0 0.0
    %432 = vmatprep.subr.mxu0 0.0
    %433 = vmatpush2.msra.mxu0 0.0
    %434 = vmatprep.subr.mxu0 0.0
    %435 = vmatpush2.msra.mxu0 0.0
    %436 = vmatprep.mubr.f32.mxu0 0.0
    %437 = vmatmul.mubr.f32.gmra.mxu0 %v370
    %v438 = vpop.f32.mrf.mxu0
    %v439 = vadd.f32 %v307, %v438
    %v440 = vpop.f32.mrf.mxu0
    %v441 = vadd.f32 %v309, %v440
    %442 = vdwg.mxu0
    %v443 = vxor.u32 %v439, 2147483648
    %v444 = vxor.u32 %v441, 2147483648
    %v445 = vmul.f32 %v443, 1.442695
    %v446 = vpow.pop %v445
    %v447 = vmul.f32 %v444, 1.442695
    %v448 = vpow.pop %v447
    %v449 = vadd.f32 %v446, 1.0
    %v450 = vadd.f32 %v448, 1.0
    %v451 = vrcp.pop %v449
    %v452 = vmul.f32 1.0, %v451
    %v453 = vrcp.pop %v450
    %v454 = vmul.f32 1.0, %v453
    %v455 = vmul.f32 %v454, 2.0
    %v456 = vsub.f32 %v455, 1.0
    %v457 = vmul.f32 %v452, %v155
    %v458 = vmul.f32 %v452, %v456
    %460 = vrot.lane.b32.xlu0 %v458, 64
    %v461 = vpop.permute.xlu0 %460
    %v463 = vadd.f32 %v457, %v461
    %v464 = vtanh.pop %v463
    %v465 = vmul.f32 %v454, %v464
    %467 = vrot.lane.b32.xlu0 %v465, 64
    %v468 = vpop.permute.xlu0 %467
    %vm470 = vcmask 261120
    %v471 = vsel %vm470, %v468, %v155
    %473 = vrot.lane.b32.xlu0 %v463, 64
    %v474 = vpop.permute.xlu0 %473
    %476 = vrot.lane.b32.xlu0 %v155, 64
    %v477 = vpop.permute.xlu0 %476
    %v479 = vsel %vm470, %v474, %v477
    %v481 = vsel %vm84, %v471, 0
    %483 = vmatprep.subr.mxu0 0.0
    %484 = vmatpush1.msra.mxu0 0.0
    %485 = vmatprep.subr.mxu0 0.0
    %486 = vmatpush1.msra.mxu0 0.0
    %487 = vmatprep.subr.mxu0 0.0
    %488 = vmatpush1.msra.mxu0 0.0
    %489 = vmatprep.subr.mxu0 0.0
    %490 = vmatpush1.msra.mxu0 0.0
    %491 = vmatprep.subr.mxu0 0.0
    %492 = vmatpush1.msra.mxu0 0.0
    %493 = vmatprep.subr.mxu0 0.0
    %494 = vmatpush1.msra.mxu0 0.0
    %495 = vmatprep.subr.mxu0 0.0
    %496 = vmatpush1.msra.mxu0 0.0
    %497 = vmatprep.subr.mxu0 0.0
    %498 = vmatpush1.msra.mxu0 0.0
    %499 = vmatprep.subr.mxu0 %v368
    %500 = vmatpush1.msra.mxu0 %v367
    %501 = vmatprep.subr.mxu0 %v366
    %502 = vmatpush1.msra.mxu0 %v365
    %503 = vmatprep.subr.mxu0 %v364
    %504 = vmatpush1.msra.mxu0 %v363
    %505 = vmatprep.subr.mxu0 %v362
    %506 = vmatpush1.msra.mxu0 %v361
    %507 = vmatprep.subr.mxu0 %v360
    %508 = vmatpush1.msra.mxu0 %v359
    %509 = vmatprep.subr.mxu0 %v358
    %510 = vmatpush1.msra.mxu0 %v357
    %511 = vmatprep.subr.mxu0 %v356
    %512 = vmatpush1.msra.mxu0 %v355
    %513 = vmatprep.subr.mxu0 %v354
    %514 = vmatpush1.msra.mxu0 %v353
    %515 = vmatprep.subr.mxu0 0.0
    %516 = vmatpush2.msra.mxu0 0.0
    %517 = vmatprep.subr.mxu0 0.0
    %518 = vmatpush2.msra.mxu0 0.0
    %519 = vmatprep.subr.mxu0 0.0
    %520 = vmatpush2.msra.mxu0 0.0
    %521 = vmatprep.subr.mxu0 0.0
    %522 = vmatpush2.msra.mxu0 0.0
    %523 = vmatprep.subr.mxu0 0.0
    %524 = vmatpush2.msra.mxu0 0.0
    %525 = vmatprep.subr.mxu0 0.0
    %526 = vmatpush2.msra.mxu0 0.0
    %527 = vmatprep.subr.mxu0 0.0
    %528 = vmatpush2.msra.mxu0 0.0
    %529 = vmatprep.subr.mxu0 0.0
    %530 = vmatpush2.msra.mxu0 0.0
    %531 = vmatprep.subr.mxu0 0.0
    %532 = vmatpush2.msra.mxu0 0.0
    %533 = vmatprep.subr.mxu0 0.0
    %534 = vmatpush2.msra.mxu0 0.0
    %535 = vmatprep.subr.mxu0 0.0
    %536 = vmatpush2.msra.mxu0 0.0
    %537 = vmatprep.subr.mxu0 0.0
    %538 = vmatpush2.msra.mxu0 0.0
    %539 = vmatprep.subr.mxu0 0.0
    %540 = vmatpush2.msra.mxu0 0.0
    %541 = vmatprep.subr.mxu0 0.0
    %542 = vmatpush2.msra.mxu0 0.0
    %543 = vmatprep.subr.mxu0 0.0
    %544 = vmatpush2.msra.mxu0 0.0
    %545 = vmatprep.subr.mxu0 0.0
    %546 = vmatpush2.msra.mxu0 0.0
    %547 = vmatprep.mubr.f32.mxu0 0.0
    %548 = vmatmul.mubr.f32.gmra.mxu0 %v481
    %v549 = vpop.f32.mrf.mxu0
    %v550 = vadd.f32 %v313, %v549
    %v551 = vpop.f32.mrf.mxu0
    %v552 = vadd.f32 %v315, %v551
    %553 = vdwg.mxu0
    %v554 = vxor.u32 %v550, 2147483648
    %v555 = vxor.u32 %v552, 2147483648
    %v556 = vmul.f32 %v554, 1.442695
    %v557 = vpow.pop %v556
    %v558 = vmul.f32 %v555, 1.442695
    %v559 = vpow.pop %v558
    %v560 = vadd.f32 %v557, 1.0
    %v561 = vadd.f32 %v559, 1.0
    %v562 = vrcp.pop %v560
    %v563 = vmul.f32 1.0, %v562
    %v564 = vrcp.pop %v561
    %v565 = vmul.f32 1.0, %v564
    %v566 = vmul.f32 %v565, 2.0
    %v567 = vsub.f32 %v566, 1.0
    %569 = vrot.lane.b32.xlu0 %v479, 64
    %v570 = vpop.permute.xlu0 %569
    %v572 = vmul.f32 %v563, %v570
    %v573 = vmul.f32 %v563, %v567
    %575 = vrot.lane.b32.xlu0 %v573, 64
    %v576 = vpop.permute.xlu0 %575
    %v578 = vadd.f32 %v572, %v576
    %v579 = vtanh.pop %v578
    %v580 = vmul.f32 %v565, %v579
    %582 = vrot.lane.b32.xlu0 %v580, 32
    %v583 = vpop.permute.xlu0 %582
    %585 = vst.msk [vmem:[#allocation2] sm:$0xff] %vm470, %v583
    %586 = vrot.lane.b32.xlu0 %v580, 64
    %v587 = vpop.permute.xlu0 %586
    %v588 = vsel %vm84, %v587, 0
    %590 = vmatprep.subr.mxu0 0.0
    %591 = vmatpush1.msra.mxu0 0.0
    %592 = vmatprep.subr.mxu0 0.0
    %593 = vmatpush1.msra.mxu0 0.0
    %594 = vmatprep.subr.mxu0 0.0
    %595 = vmatpush1.msra.mxu0 0.0
    %596 = vmatprep.subr.mxu0 0.0
    %597 = vmatpush1.msra.mxu0 0.0
    %598 = vmatprep.subr.mxu0 0.0
    %599 = vmatpush1.msra.mxu0 0.0
    %600 = vmatprep.subr.mxu0 0.0
    %601 = vmatpush1.msra.mxu0 0.0
    %602 = vmatprep.subr.mxu0 0.0
    %603 = vmatpush1.msra.mxu0 0.0
    %604 = vmatprep.subr.mxu0 0.0
    %605 = vmatpush1.msra.mxu0 0.0
    %606 = vmatprep.subr.mxu0 %v368
    %607 = vmatpush1.msra.mxu0 %v367
    %608 = vmatprep.subr.mxu0 %v366
    %609 = vmatpush1.msra.mxu0 %v365
    %610 = vmatprep.subr.mxu0 %v364
    %611 = vmatpush1.msra.mxu0 %v363
    %612 = vmatprep.subr.mxu0 %v362
    %613 = vmatpush1.msra.mxu0 %v361
    %614 = vmatprep.subr.mxu0 %v360
    %615 = vmatpush1.msra.mxu0 %v359
    %616 = vmatprep.subr.mxu0 %v358
    %617 = vmatpush1.msra.mxu0 %v357
    %618 = vmatprep.subr.mxu0 %v356
    %619 = vmatpush1.msra.mxu0 %v355
    %620 = vmatprep.subr.mxu0 %v354
    %621 = vmatpush1.msra.mxu0 %v353
    %622 = vmatprep.subr.mxu0 0.0
    %623 = vmatpush2.msra.mxu0 0.0
    %624 = vmatprep.subr.mxu0 0.0
    %625 = vmatpush2.msra.mxu0 0.0
    %626 = vmatprep.subr.mxu0 0.0
    %627 = vmatpush2.msra.mxu0 0.0
    %628 = vmatprep.subr.mxu0 0.0
    %629 = vmatpush2.msra.mxu0 0.0
    %630 = vmatprep.subr.mxu0 0.0
    %631 = vmatpush2.msra.mxu0 0.0
    %632 = vmatprep.subr.mxu0 0.0
    %633 = vmatpush2.msra.mxu0 0.0
    %634 = vmatprep.subr.mxu0 0.0
    %635 = vmatpush2.msra.mxu0 0.0
    %636 = vmatprep.subr.mxu0 0.0
    %637 = vmatpush2.msra.mxu0 0.0
    %638 = vmatprep.subr.mxu0 0.0
    %639 = vmatpush2.msra.mxu0 0.0
    %640 = vmatprep.subr.mxu0 0.0
    %641 = vmatpush2.msra.mxu0 0.0
    %642 = vmatprep.subr.mxu0 0.0
    %643 = vmatpush2.msra.mxu0 0.0
    %644 = vmatprep.subr.mxu0 0.0
    %645 = vmatpush2.msra.mxu0 0.0
    %646 = vmatprep.subr.mxu0 0.0
    %647 = vmatpush2.msra.mxu0 0.0
    %648 = vmatprep.subr.mxu0 0.0
    %649 = vmatpush2.msra.mxu0 0.0
    %650 = vmatprep.subr.mxu0 0.0
    %651 = vmatpush2.msra.mxu0 0.0
    %652 = vmatprep.subr.mxu0 0.0
    %653 = vmatpush2.msra.mxu0 0.0
    %654 = vmatprep.mubr.f32.mxu0 0.0
    %655 = vmatmul.mubr.f32.gmra.mxu0 %v588
    %v656 = vpop.f32.mrf.mxu0
    %v657 = vadd.f32 %v319, %v656
    %v658 = vpop.f32.mrf.mxu0
    %v659 = vadd.f32 %v321, %v658
    %660 = vdwg.mxu0
    %v661 = vxor.u32 %v657, 2147483648
    %v662 = vxor.u32 %v659, 2147483648
    %v663 = vmul.f32 %v661, 1.442695
    %v664 = vpow.pop %v663
    %v665 = vmul.f32 %v662, 1.442695
    %v666 = vpow.pop %v665
    %v667 = vadd.f32 %v664, 1.0
    %v668 = vadd.f32 %v666, 1.0
    %v669 = vrcp.pop %v667
    %v670 = vmul.f32 1.0, %v669
    %v671 = vrcp.pop %v668
    %v672 = vmul.f32 1.0, %v671
    %v673 = vmul.f32 %v672, 2.0
    %v674 = vsub.f32 %v673, 1.0
    %v675 = vmul.f32 %v670, %v578
    %v676 = vmul.f32 %v670, %v674
    %678 = vrot.lane.b32.xlu0 %v676, 64
    %v679 = vpop.permute.xlu0 %678
    %v681 = vadd.f32 %v675, %v679
    %v682 = vtanh.pop %v681
    %v683 = vmul.f32 %v672, %v682
    %685 = vrot.lane.b32.xlu0 %v683, 32
    %v686 = vpop.permute.xlu0 %685
    %688 = vst.msk [vmem:[#allocation2 + $0x8] sm:$0xff] %vm470, %v686
    %689 = vrot.lane.b32.xlu0 %v683, 64
    %v690 = vpop.permute.xlu0 %689
    %v691 = vsel %vm84, %v690, 0
    %693 = vmatprep.subr.mxu0 0.0
    %694 = vmatpush1.msra.mxu0 0.0
    %695 = vmatprep.subr.mxu0 0.0
    %696 = vmatpush1.msra.mxu0 0.0
    %697 = vmatprep.subr.mxu0 0.0
    %698 = vmatpush1.msra.mxu0 0.0
    %699 = vmatprep.subr.mxu0 0.0
    %700 = vmatpush1.msra.mxu0 0.0
    %701 = vmatprep.subr.mxu0 0.0
    %702 = vmatpush1.msra.mxu0 0.0
    %703 = vmatprep.subr.mxu0 0.0
    %704 = vmatpush1.msra.mxu0 0.0
    %705 = vmatprep.subr.mxu0 0.0
    %706 = vmatpush1.msra.mxu0 0.0
    %707 = vmatprep.subr.mxu0 0.0
    %708 = vmatpush1.msra.mxu0 0.0
    %709 = vmatprep.subr.mxu0 %v368
    %710 = vmatpush1.msra.mxu0 %v367
    %711 = vmatprep.subr.mxu0 %v366
    %712 = vmatpush1.msra.mxu0 %v365
    %713 = vmatprep.subr.mxu0 %v364
    %714 = vmatpush1.msra.mxu0 %v363
    %715 = vmatprep.subr.mxu0 %v362
    %716 = vmatpush1.msra.mxu0 %v361
    %717 = vmatprep.subr.mxu0 %v360
    %718 = vmatpush1.msra.mxu0 %v359
    %719 = vmatprep.subr.mxu0 %v358
    %720 = vmatpush1.msra.mxu0 %v357
    %721 = vmatprep.subr.mxu0 %v356
    %722 = vmatpush1.msra.mxu0 %v355
    %723 = vmatprep.subr.mxu0 %v354
    %724 = vmatpush1.msra.mxu0 %v353
    %725 = vmatprep.subr.mxu0 0.0
    %726 = vmatpush2.msra.mxu0 0.0
    %727 = vmatprep.subr.mxu0 0.0
    %728 = vmatpush2.msra.mxu0 0.0
    %729 = vmatprep.subr.mxu0 0.0
    %730 = vmatpush2.msra.mxu0 0.0
    %731 = vmatprep.subr.mxu0 0.0
    %732 = vmatpush2.msra.mxu0 0.0
    %733 = vmatprep.subr.mxu0 0.0
    %734 = vmatpush2.msra.mxu0 0.0
    %735 = vmatprep.subr.mxu0 0.0
    %736 = vmatpush2.msra.mxu0 0.0
    %737 = vmatprep.subr.mxu0 0.0
    %738 = vmatpush2.msra.mxu0 0.0
    %739 = vmatprep.subr.mxu0 0.0
    %740 = vmatpush2.msra.mxu0 0.0
    %741 = vmatprep.subr.mxu0 0.0
    %742 = vmatpush2.msra.mxu0 0.0
    %743 = vmatprep.subr.mxu0 0.0
    %744 = vmatpush2.msra.mxu0 0.0
    %745 = vmatprep.subr.mxu0 0.0
    %746 = vmatpush2.msra.mxu0 0.0
    %747 = vmatprep.subr.mxu0 0.0
    %748 = vmatpush2.msra.mxu0 0.0
    %749 = vmatprep.subr.mxu0 0.0
    %750 = vmatpush2.msra.mxu0 0.0
    %751 = vmatprep.subr.mxu0 0.0
    %752 = vmatpush2.msra.mxu0 0.0
    %753 = vmatprep.subr.mxu0 0.0
    %754 = vmatpush2.msra.mxu0 0.0
    %755 = vmatprep.subr.mxu0 0.0
    %756 = vmatpush2.msra.mxu0 0.0
    %757 = vmatprep.mubr.f32.mxu0 0.0
    %758 = vmatmul.mubr.f32.gmra.mxu0 %v691
    %v759 = vpop.f32.mrf.mxu0
    %v760 = vadd.f32 %v325, %v759
    %v761 = vpop.f32.mrf.mxu0
    %v762 = vadd.f32 %v327, %v761
    %763 = vdwg.mxu0
    %v764 = vxor.u32 %v760, 2147483648
    %v765 = vxor.u32 %v762, 2147483648
    %v766 = vmul.f32 %v764, 1.442695
    %v767 = vpow.pop %v766
    %v768 = vmul.f32 %v765, 1.442695
    %v769 = vpow.pop %v768
    %v770 = vadd.f32 %v767, 1.0
    %v771 = vadd.f32 %v769, 1.0
    %v772 = vrcp.pop %v770
    %v773 = vmul.f32 1.0, %v772
    %v774 = vrcp.pop %v771
    %v775 = vmul.f32 1.0, %v774
    %v776 = vmul.f32 %v775, 2.0
    %v777 = vsub.f32 %v776, 1.0
    %v778 = vmul.f32 %v773, %v681
    %v779 = vmul.f32 %v773, %v777
    %781 = vrot.lane.b32.xlu0 %v779, 64
    %v782 = vpop.permute.xlu0 %781
    %v784 = vadd.f32 %v778, %v782
    %v785 = vtanh.pop %v784
    %v786 = vmul.f32 %v775, %v785
    %788 = vrot.lane.b32.xlu0 %v786, 32
    %v789 = vpop.permute.xlu0 %788
    %791 = vst.msk [vmem:[#allocation2 + $0x10] sm:$0xff] %vm470, %v789
    %792 = vrot.lane.b32.xlu0 %v786, 64
    %v793 = vpop.permute.xlu0 %792
    %v794 = vsel %vm84, %v793, 0
    %796 = vmatprep.subr.mxu0 0.0
    %797 = vmatpush1.msra.mxu0 0.0
    %798 = vmatprep.subr.mxu0 0.0
    %799 = vmatpush1.msra.mxu0 0.0
    %800 = vmatprep.subr.mxu0 0.0
    %801 = vmatpush1.msra.mxu0 0.0
    %802 = vmatprep.subr.mxu0 0.0
    %803 = vmatpush1.msra.mxu0 0.0
    %804 = vmatprep.subr.mxu0 0.0
    %805 = vmatpush1.msra.mxu0 0.0
    %806 = vmatprep.subr.mxu0 0.0
    %807 = vmatpush1.msra.mxu0 0.0
    %808 = vmatprep.subr.mxu0 0.0
    %809 = vmatpush1.msra.mxu0 0.0
    %810 = vmatprep.subr.mxu0 0.0
    %811 = vmatpush1.msra.mxu0 0.0
    %812 = vmatprep.subr.mxu0 %v368
    %813 = vmatpush1.msra.mxu0 %v367
    %814 = vmatprep.subr.mxu0 %v366
    %815 = vmatpush1.msra.mxu0 %v365
    %816 = vmatprep.subr.mxu0 %v364
    %817 = vmatpush1.msra.mxu0 %v363
    %818 = vmatprep.subr.mxu0 %v362
    %819 = vmatpush1.msra.mxu0 %v361
    %820 = vmatprep.subr.mxu0 %v360
    %821 = vmatpush1.msra.mxu0 %v359
    %822 = vmatprep.subr.mxu0 %v358
    %823 = vmatpush1.msra.mxu0 %v357
    %824 = vmatprep.subr.mxu0 %v356
    %825 = vmatpush1.msra.mxu0 %v355
    %826 = vmatprep.subr.mxu0 %v354
    %827 = vmatpush1.msra.mxu0 %v353
    %828 = vmatprep.subr.mxu0 0.0
    %829 = vmatpush2.msra.mxu0 0.0
    %830 = vmatprep.subr.mxu0 0.0
    %831 = vmatpush2.msra.mxu0 0.0
    %832 = vmatprep.subr.mxu0 0.0
    %833 = vmatpush2.msra.mxu0 0.0
    %834 = vmatprep.subr.mxu0 0.0
    %835 = vmatpush2.msra.mxu0 0.0
    %836 = vmatprep.subr.mxu0 0.0
    %837 = vmatpush2.msra.mxu0 0.0
    %838 = vmatprep.subr.mxu0 0.0
    %839 = vmatpush2.msra.mxu0 0.0
    %840 = vmatprep.subr.mxu0 0.0
    %841 = vmatpush2.msra.mxu0 0.0
    %842 = vmatprep.subr.mxu0 0.0
    %843 = vmatpush2.msra.mxu0 0.0
    %844 = vmatprep.subr.mxu0 0.0
    %845 = vmatpush2.msra.mxu0 0.0
    %846 = vmatprep.subr.mxu0 0.0
    %847 = vmatpush2.msra.mxu0 0.0
    %848 = vmatprep.subr.mxu0 0.0
    %849 = vmatpush2.msra.mxu0 0.0
    %850 = vmatprep.subr.mxu0 0.0
    %851 = vmatpush2.msra.mxu0 0.0
    %852 = vmatprep.subr.mxu0 0.0
    %853 = vmatpush2.msra.mxu0 0.0
    %854 = vmatprep.subr.mxu0 0.0
    %855 = vmatpush2.msra.mxu0 0.0
    %856 = vmatprep.subr.mxu0 0.0
    %857 = vmatpush2.msra.mxu0 0.0
    %858 = vmatprep.subr.mxu0 0.0
    %859 = vmatpush2.msra.mxu0 0.0
    %860 = vmatprep.mubr.f32.mxu0 0.0
    %861 = vmatmul.mubr.f32.gmra.mxu0 %v794
    %v862 = vpop.f32.mrf.mxu0
    %v863 = vadd.f32 %v331, %v862
    %v864 = vpop.f32.mrf.mxu0
    %v865 = vadd.f32 %v333, %v864
    %866 = vdwg.mxu0
    %v867 = vxor.u32 %v863, 2147483648
    %v868 = vxor.u32 %v865, 2147483648
    %v869 = vmul.f32 %v867, 1.442695
    %v870 = vpow.pop %v869
    %v871 = vmul.f32 %v868, 1.442695
    %v872 = vpow.pop %v871
    %v873 = vadd.f32 %v870, 1.0
    %v874 = vadd.f32 %v872, 1.0
    %v875 = vrcp.pop %v873
    %v876 = vmul.f32 1.0, %v875
    %v877 = vrcp.pop %v874
    %v878 = vmul.f32 1.0, %v877
    %v879 = vmul.f32 %v878, 2.0
    %v880 = vsub.f32 %v879, 1.0
    %v881 = vmul.f32 %v876, %v784
    %v882 = vmul.f32 %v876, %v880
    %884 = vrot.lane.b32.xlu0 %v882, 64
    %v885 = vpop.permute.xlu0 %884
    %v887 = vadd.f32 %v881, %v885
    %v888 = vtanh.pop %v887
    %v889 = vmul.f32 %v878, %v888
    %891 = vrot.lane.b32.xlu0 %v889, 32
    %v892 = vpop.permute.xlu0 %891
    %894 = vst.msk [vmem:[#allocation2 + $0x18] sm:$0xff] %vm470, %v892
    %895 = vrot.lane.b32.xlu0 %v889, 64
    %v896 = vpop.permute.xlu0 %895
    %v897 = vsel %vm84, %v896, 0
    %899 = vmatprep.subr.mxu0 0.0
    %900 = vmatpush1.msra.mxu0 0.0
    %901 = vmatprep.subr.mxu0 0.0
    %902 = vmatpush1.msra.mxu0 0.0
    %903 = vmatprep.subr.mxu0 0.0
    %904 = vmatpush1.msra.mxu0 0.0
    %905 = vmatprep.subr.mxu0 0.0
    %906 = vmatpush1.msra.mxu0 0.0
    %907 = vmatprep.subr.mxu0 0.0
    %908 = vmatpush1.msra.mxu0 0.0
    %909 = vmatprep.subr.mxu0 0.0
    %910 = vmatpush1.msra.mxu0 0.0
    %911 = vmatprep.subr.mxu0 0.0
    %912 = vmatpush1.msra.mxu0 0.0
    %913 = vmatprep.subr.mxu0 0.0
    %914 = vmatpush1.msra.mxu0 0.0
    %915 = vmatprep.subr.mxu0 %v368
    %916 = vmatpush1.msra.mxu0 %v367
    %917 = vmatprep.subr.mxu0 %v366
    %918 = vmatpush1.msra.mxu0 %v365
    %919 = vmatprep.subr.mxu0 %v364
    %920 = vmatpush1.msra.mxu0 %v363
    %921 = vmatprep.subr.mxu0 %v362
    %922 = vmatpush1.msra.mxu0 %v361
    %923 = vmatprep.subr.mxu0 %v360
    %924 = vmatpush1.msra.mxu0 %v359
    %925 = vmatprep.subr.mxu0 %v358
    %926 = vmatpush1.msra.mxu0 %v357
    %927 = vmatprep.subr.mxu0 %v356
    %928 = vmatpush1.msra.mxu0 %v355
    %929 = vmatprep.subr.mxu0 %v354
    %930 = vmatpush1.msra.mxu0 %v353
    %931 = vmatprep.subr.mxu0 0.0
    %932 = vmatpush2.msra.mxu0 0.0
    %933 = vmatprep.subr.mxu0 0.0
    %934 = vmatpush2.msra.mxu0 0.0
    %935 = vmatprep.subr.mxu0 0.0
    %936 = vmatpush2.msra.mxu0 0.0
    %937 = vmatprep.subr.mxu0 0.0
    %938 = vmatpush2.msra.mxu0 0.0
    %939 = vmatprep.subr.mxu0 0.0
    %940 = vmatpush2.msra.mxu0 0.0
    %941 = vmatprep.subr.mxu0 0.0
    %942 = vmatpush2.msra.mxu0 0.0
    %943 = vmatprep.subr.mxu0 0.0
    %944 = vmatpush2.msra.mxu0 0.0
    %945 = vmatprep.subr.mxu0 0.0
    %946 = vmatpush2.msra.mxu0 0.0
    %947 = vmatprep.subr.mxu0 0.0
    %948 = vmatpush2.msra.mxu0 0.0
    %949 = vmatprep.subr.mxu0 0.0
    %950 = vmatpush2.msra.mxu0 0.0
    %951 = vmatprep.subr.mxu0 0.0
    %952 = vmatpush2.msra.mxu0 0.0
    %953 = vmatprep.subr.mxu0 0.0
    %954 = vmatpush2.msra.mxu0 0.0
    %955 = vmatprep.subr.mxu0 0.0
    %956 = vmatpush2.msra.mxu0 0.0
    %957 = vmatprep.subr.mxu0 0.0
    %958 = vmatpush2.msra.mxu0 0.0
    %959 = vmatprep.subr.mxu0 0.0
    %960 = vmatpush2.msra.mxu0 0.0
    %961 = vmatprep.subr.mxu0 0.0
    %962 = vmatpush2.msra.mxu0 0.0
    %963 = vmatprep.mubr.f32.mxu0 0.0
    %964 = vmatmul.mubr.f32.gmra.mxu0 %v897
    %v965 = vpop.f32.mrf.mxu0
    %v966 = vadd.f32 %v337, %v965
    %v967 = vpop.f32.mrf.mxu0
    %v968 = vadd.f32 %v339, %v967
    %969 = vdwg.mxu0
    %v970 = vxor.u32 %v966, 2147483648
    %v971 = vxor.u32 %v968, 2147483648
    %v972 = vmul.f32 %v970, 1.442695
    %v973 = vpow.pop %v972
    %v974 = vmul.f32 %v971, 1.442695
    %v975 = vpow.pop %v974
    %v976 = vadd.f32 %v973, 1.0
    %v977 = vadd.f32 %v975, 1.0
    %v978 = vrcp.pop %v976
    %v979 = vmul.f32 1.0, %v978
    %v980 = vrcp.pop %v977
    %v981 = vmul.f32 1.0, %v980
    %v982 = vmul.f32 %v981, 2.0
    %v983 = vsub.f32 %v982, 1.0
    %v984 = vmul.f32 %v979, %v887
    %v985 = vmul.f32 %v979, %v983
    %987 = vrot.lane.b32.xlu0 %v985, 64
    %v988 = vpop.permute.xlu0 %987
    %v990 = vadd.f32 %v984, %v988
    %v991 = vtanh.pop %v990
    %v992 = vmul.f32 %v981, %v991
    %994 = vrot.lane.b32.xlu0 %v992, 32
    %v995 = vpop.permute.xlu0 %994
    %997 = vst.msk [vmem:[#allocation2 + $0x20] sm:$0xff] %vm470, %v995
    %998 = vrot.lane.b32.xlu0 %v992, 64
    %v999 = vpop.permute.xlu0 %998
    %v1000 = vsel %vm84, %v999, 0
    %1002 = vmatprep.subr.mxu0 0.0
    %1003 = vmatpush1.msra.mxu0 0.0
    %1004 = vmatprep.subr.mxu0 0.0
    %1005 = vmatpush1.msra.mxu0 0.0
    %1006 = vmatprep.subr.mxu0 0.0
    %1007 = vmatpush1.msra.mxu0 0.0
    %1008 = vmatprep.subr.mxu0 0.0
    %1009 = vmatpush1.msra.mxu0 0.0
    %1010 = vmatprep.subr.mxu0 0.0
    %1011 = vmatpush1.msra.mxu0 0.0
    %1012 = vmatprep.subr.mxu0 0.0
    %1013 = vmatpush1.msra.mxu0 0.0
    %1014 = vmatprep.subr.mxu0 0.0
    %1015 = vmatpush1.msra.mxu0 0.0
    %1016 = vmatprep.subr.mxu0 0.0
    %1017 = vmatpush1.msra.mxu0 0.0
    %1018 = vmatprep.subr.mxu0 %v368
    %1019 = vmatpush1.msra.mxu0 %v367
    %1020 = vmatprep.subr.mxu0 %v366
    %1021 = vmatpush1.msra.mxu0 %v365
    %1022 = vmatprep.subr.mxu0 %v364
    %1023 = vmatpush1.msra.mxu0 %v363
    %1024 = vmatprep.subr.mxu0 %v362
    %1025 = vmatpush1.msra.mxu0 %v361
    %1026 = vmatprep.subr.mxu0 %v360
    %1027 = vmatpush1.msra.mxu0 %v359
    %1028 = vmatprep.subr.mxu0 %v358
    %1029 = vmatpush1.msra.mxu0 %v357
    %1030 = vmatprep.subr.mxu0 %v356
    %1031 = vmatpush1.msra.mxu0 %v355
    %1032 = vmatprep.subr.mxu0 %v354
    %1033 = vmatpush1.msra.mxu0 %v353
    %1034 = vmatprep.subr.mxu0 0.0
    %1035 = vmatpush2.msra.mxu0 0.0
    %1036 = vmatprep.subr.mxu0 0.0
    %1037 = vmatpush2.msra.mxu0 0.0
    %1038 = vmatprep.subr.mxu0 0.0
    %1039 = vmatpush2.msra.mxu0 0.0
    %1040 = vmatprep.subr.mxu0 0.0
    %1041 = vmatpush2.msra.mxu0 0.0
    %1042 = vmatprep.subr.mxu0 0.0
    %1043 = vmatpush2.msra.mxu0 0.0
    %1044 = vmatprep.subr.mxu0 0.0
    %1045 = vmatpush2.msra.mxu0 0.0
    %1046 = vmatprep.subr.mxu0 0.0
    %1047 = vmatpush2.msra.mxu0 0.0
    %1048 = vmatprep.subr.mxu0 0.0
    %1049 = vmatpush2.msra.mxu0 0.0
    %1050 = vmatprep.subr.mxu0 0.0
    %1051 = vmatpush2.msra.mxu0 0.0
    %1052 = vmatprep.subr.mxu0 0.0
    %1053 = vmatpush2.msra.mxu0 0.0
    %1054 = vmatprep.subr.mxu0 0.0
    %1055 = vmatpush2.msra.mxu0 0.0
    %1056 = vmatprep.subr.mxu0 0.0
    %1057 = vmatpush2.msra.mxu0 0.0
    %1058 = vmatprep.subr.mxu0 0.0
    %1059 = vmatpush2.msra.mxu0 0.0
    %1060 = vmatprep.subr.mxu0 0.0
    %1061 = vmatpush2.msra.mxu0 0.0
    %1062 = vmatprep.subr.mxu0 0.0
    %1063 = vmatpush2.msra.mxu0 0.0
    %1064 = vmatprep.subr.mxu0 0.0
    %1065 = vmatpush2.msra.mxu0 0.0
    %1066 = vmatprep.mubr.f32.mxu0 0.0
    %1067 = vmatmul.mubr.f32.gmra.mxu0 %v1000
    %v1068 = vpop.f32.mrf.mxu0
    %v1069 = vadd.f32 %v343, %v1068
    %v1070 = vpop.f32.mrf.mxu0
    %v1071 = vadd.f32 %v345, %v1070
    %1072 = vdwg.mxu0
    %v1073 = vxor.u32 %v1069, 2147483648
    %v1074 = vxor.u32 %v1071, 2147483648
    %v1075 = vmul.f32 %v1073, 1.442695
    %v1076 = vpow.pop %v1075
    %v1077 = vmul.f32 %v1074, 1.442695
    %v1078 = vpow.pop %v1077
    %v1079 = vadd.f32 %v1076, 1.0
    %v1080 = vadd.f32 %v1078, 1.0
    %v1081 = vrcp.pop %v1079
    %v1082 = vmul.f32 1.0, %v1081
    %v1083 = vrcp.pop %v1080
    %v1084 = vmul.f32 1.0, %v1083
    %v1085 = vmul.f32 %v1084, 2.0
    %v1086 = vsub.f32 %v1085, 1.0
    %v1087 = vmul.f32 %v1082, %v990
    %v1088 = vmul.f32 %v1082, %v1086
    %1090 = vrot.lane.b32.xlu0 %v1088, 64
    %v1091 = vpop.permute.xlu0 %1090
    %v1093 = vadd.f32 %v1087, %v1091
    %v1094 = vtanh.pop %v1093
    %v1095 = vmul.f32 %v1084, %v1094
    %1097 = vrot.lane.b32.xlu0 %v1095, 32
    %v1098 = vpop.permute.xlu0 %1097
    %1100 = vst.msk [vmem:[#allocation2 + $0x28] sm:$0xff] %vm470, %v1098
    %1101 = vrot.lane.b32.xlu0 %v1095, 64
    %v1102 = vpop.permute.xlu0 %1101
    %v1103 = vsel %vm84, %v1102, 0
    %1105 = vmatprep.subr.mxu0 0.0
    %1106 = vmatpush1.msra.mxu0 0.0
    %1107 = vmatprep.subr.mxu0 0.0
    %1108 = vmatpush1.msra.mxu0 0.0
    %1109 = vmatprep.subr.mxu0 0.0
    %1110 = vmatpush1.msra.mxu0 0.0
    %1111 = vmatprep.subr.mxu0 0.0
    %1112 = vmatpush1.msra.mxu0 0.0
    %1113 = vmatprep.subr.mxu0 0.0
    %1114 = vmatpush1.msra.mxu0 0.0
    %1115 = vmatprep.subr.mxu0 0.0
    %1116 = vmatpush1.msra.mxu0 0.0
    %1117 = vmatprep.subr.mxu0 0.0
    %1118 = vmatpush1.msra.mxu0 0.0
    %1119 = vmatprep.subr.mxu0 0.0
    %1120 = vmatpush1.msra.mxu0 0.0
    %1121 = vmatprep.subr.mxu0 %v368
    %1122 = vmatpush1.msra.mxu0 %v367
    %1123 = vmatprep.subr.mxu0 %v366
    %1124 = vmatpush1.msra.mxu0 %v365
    %1125 = vmatprep.subr.mxu0 %v364
    %1126 = vmatpush1.msra.mxu0 %v363
    %1127 = vmatprep.subr.mxu0 %v362
    %1128 = vmatpush1.msra.mxu0 %v361
    %1129 = vmatprep.subr.mxu0 %v360
    %1130 = vmatpush1.msra.mxu0 %v359
    %1131 = vmatprep.subr.mxu0 %v358
    %1132 = vmatpush1.msra.mxu0 %v357
    %1133 = vmatprep.subr.mxu0 %v356
    %1134 = vmatpush1.msra.mxu0 %v355
    %1135 = vmatprep.subr.mxu0 %v354
    %1136 = vmatpush1.msra.mxu0 %v353
    %1137 = vmatprep.subr.mxu0 0.0
    %1138 = vmatpush2.msra.mxu0 0.0
    %1139 = vmatprep.subr.mxu0 0.0
    %1140 = vmatpush2.msra.mxu0 0.0
    %1141 = vmatprep.subr.mxu0 0.0
    %1142 = vmatpush2.msra.mxu0 0.0
    %1143 = vmatprep.subr.mxu0 0.0
    %1144 = vmatpush2.msra.mxu0 0.0
    %1145 = vmatprep.subr.mxu0 0.0
    %1146 = vmatpush2.msra.mxu0 0.0
    %1147 = vmatprep.subr.mxu0 0.0
    %1148 = vmatpush2.msra.mxu0 0.0
    %1149 = vmatprep.subr.mxu0 0.0
    %1150 = vmatpush2.msra.mxu0 0.0
    %1151 = vmatprep.subr.mxu0 0.0
    %1152 = vmatpush2.msra.mxu0 0.0
    %1153 = vmatprep.subr.mxu0 0.0
    %1154 = vmatpush2.msra.mxu0 0.0
    %1155 = vmatprep.subr.mxu0 0.0
    %1156 = vmatpush2.msra.mxu0 0.0
    %1157 = vmatprep.subr.mxu0 0.0
    %1158 = vmatpush2.msra.mxu0 0.0
    %1159 = vmatprep.subr.mxu0 0.0
    %1160 = vmatpush2.msra.mxu0 0.0
    %1161 = vmatprep.subr.mxu0 0.0
    %1162 = vmatpush2.msra.mxu0 0.0
    %1163 = vmatprep.subr.mxu0 0.0
    %1164 = vmatpush2.msra.mxu0 0.0
    %1165 = vmatprep.subr.mxu0 0.0
    %1166 = vmatpush2.msra.mxu0 0.0
    %1167 = vmatprep.subr.mxu0 0.0
    %1168 = vmatpush2.msra.mxu0 0.0
    %1169 = vmatprep.mubr.f32.mxu0 0.0
    %1170 = vmatmul.mubr.f32.gmra.mxu0 %v1103
    %v1171 = vpop.f32.mrf.mxu0
    %v1172 = vadd.f32 %v349, %v1171
    %v1173 = vpop.f32.mrf.mxu0
    %v1174 = vadd.f32 %v351, %v1173
    %1175 = vdwg.mxu0
    %v1176 = vxor.u32 %v1172, 2147483648
    %v1177 = vxor.u32 %v1174, 2147483648
    %v1178 = vmul.f32 %v1176, 1.442695
    %v1179 = vpow.pop %v1178
    %v1180 = vmul.f32 %v1177, 1.442695
    %v1181 = vpow.pop %v1180
    %v1182 = vadd.f32 %v1179, 1.0
    %v1183 = vadd.f32 %v1181, 1.0
    %v1184 = vrcp.pop %v1182
    %v1185 = vmul.f32 1.0, %v1184
    %v1186 = vrcp.pop %v1183
    %v1187 = vmul.f32 1.0, %v1186
    %v1188 = vmul.f32 %v1187, 2.0
    %v1189 = vsub.f32 %v1188, 1.0
    %v1190 = vmul.f32 %v1185, %v1093
    %v1191 = vmul.f32 %v1185, %v1189
    %1193 = vrot.lane.b32.xlu0 %v1191, 64
    %v1194 = vpop.permute.xlu0 %1193
    %v1196 = vadd.f32 %v1190, %v1194
    %v1197 = vtanh.pop %v1196
    %v1198 = vmul.f32 %v1187, %v1197
    %1200 = vrot.lane.b32.xlu0 %v1198, 32
    %v1201 = vpop.permute.xlu0 %1200
    %1203 = vst.msk [vmem:[#allocation2 + $0x30] sm:$0xff] %vm470, %v1201
    %v1204 = vld [vmem:[#allocation2] sm:$0xff]
    %v1205 = vld [vmem:[#allocation2 + $0x8] sm:$0xff]
    %v1206 = vld [vmem:[#allocation2 + $0x10] sm:$0xff]
    %v1207 = vld [vmem:[#allocation2 + $0x18] sm:$0xff]
    %v1208 = vld [vmem:[#allocation2 + $0x20] sm:$0xff]
    %v1209 = vld [vmem:[#allocation2 + $0x28] sm:$0xff]
    %v1210 = vld [vmem:[#allocation2 + $0x30] sm:$0xff]
    %v1211 = vld [vmem:[%s6] sm:$0xff]
    %v1212 = vld [vmem:[%s6 + $0x8] sm:$0xff]
    %v1213 = vld [vmem:[%s6 + $0x10] sm:$0xff]
    %v1214 = vld [vmem:[%s6 + $0x18] sm:$0xff]
    %v1215 = vld [vmem:[%s7] sm:$0x1]
    %v1217 = vlaneseq
    %v1218 = vshrl.u32 %v1217, 7
    %v1219 = vsub.s32 0, %v1218
    %v1220 = vrot.slane %v1215, %v1219
    %v1223 = vsel %vm470, %v1204, 0
    %v1226 = vsel %vm470, %v1205, 0
    %v1229 = vsel %vm470, %v1206, 0
    %v1232 = vsel %vm470, %v1207, 0
    %v1235 = vsel %vm470, %v1208, 0
    %v1238 = vsel %vm470, %v1209, 0
    %v1241 = vsel %vm470, %v1210, 0
    %1243 = vmatprep.subr.mxu0 0.0
    %1244 = vmatpush1.msra.mxu0 0.0
    %1245 = vmatprep.subr.mxu0 0.0
    %1246 = vmatpush1.msra.mxu0 0.0
    %1247 = vmatprep.subr.mxu0 0.0
    %1248 = vmatpush1.msra.mxu0 0.0
    %1249 = vmatprep.subr.mxu0 0.0
    %1250 = vmatpush1.msra.mxu0 0.0
    %1251 = vmatprep.subr.mxu0 0.0
    %1252 = vmatpush1.msra.mxu0 0.0
    %1253 = vmatprep.subr.mxu0 0.0
    %1254 = vmatpush1.msra.mxu0 0.0
    %1255 = vmatprep.subr.mxu0 0.0
    %1256 = vmatpush1.msra.mxu0 0.0
    %1257 = vmatprep.subr.mxu0 0.0
    %1258 = vmatpush1.msra.mxu0 0.0
    %1259 = vmatprep.subr.mxu0 0.0
    %1260 = vmatpush1.msra.mxu0 0.0
    %1261 = vmatprep.subr.mxu0 0.0
    %1262 = vmatpush1.msra.mxu0 0.0
    %1263 = vmatprep.subr.mxu0 0.0
    %1264 = vmatpush1.msra.mxu0 0.0
    %1265 = vmatprep.subr.mxu0 0.0
    %1266 = vmatpush1.msra.mxu0 0.0
    %1267 = vmatprep.subr.mxu0 0.0
    %1268 = vmatpush1.msra.mxu0 %v1214
    %1269 = vmatprep.subr.mxu0 0.0
    %1270 = vmatpush1.msra.mxu0 %v1213
    %1271 = vmatprep.subr.mxu0 0.0
    %1272 = vmatpush1.msra.mxu0 %v1212
    %1273 = vmatprep.subr.mxu0 0.0
    %1274 = vmatpush1.msra.mxu0 %v1211
    %1275 = vmatprep.subr.mxu0 0.0
    %1276 = vmatpush2.msra.mxu0 0.0
    %1277 = vmatprep.subr.mxu0 0.0
    %1278 = vmatpush2.msra.mxu0 0.0
    %1279 = vmatprep.subr.mxu0 0.0
    %1280 = vmatpush2.msra.mxu0 0.0
    %1281 = vmatprep.subr.mxu0 0.0
    %1282 = vmatpush2.msra.mxu0 0.0
    %1283 = vmatprep.subr.mxu0 0.0
    %1284 = vmatpush2.msra.mxu0 0.0
    %1285 = vmatprep.subr.mxu0 0.0
    %1286 = vmatpush2.msra.mxu0 0.0
    %1287 = vmatprep.subr.mxu0 0.0
    %1288 = vmatpush2.msra.mxu0 0.0
    %1289 = vmatprep.subr.mxu0 0.0
    %1290 = vmatpush2.msra.mxu0 0.0
    %1291 = vmatprep.subr.mxu0 0.0
    %1292 = vmatpush2.msra.mxu0 0.0
    %1293 = vmatprep.subr.mxu0 0.0
    %1294 = vmatpush2.msra.mxu0 0.0
    %1295 = vmatprep.subr.mxu0 0.0
    %1296 = vmatpush2.msra.mxu0 0.0
    %1297 = vmatprep.subr.mxu0 0.0
    %1298 = vmatpush2.msra.mxu0 0.0
    %1299 = vmatprep.subr.mxu0 0.0
    %1300 = vmatpush2.msra.mxu0 0.0
    %1301 = vmatprep.subr.mxu0 0.0
    %1302 = vmatpush2.msra.mxu0 0.0
    %1303 = vmatprep.subr.mxu0 0.0
    %1304 = vmatpush2.msra.mxu0 0.0
    %1305 = vmatprep.subr.mxu0 0.0
    %1306 = vmatpush2.msra.mxu0 0.0
    %1307 = vmatprep.mubr.f32.mxu0 0.0
    %1308 = vmatmul.mubr.f32.gmra.mxu0 %v1223
    %v1309 = vpop.f32.mrf.mxu0
    %v1310 = vadd.f32 %v1220, %v1309
    %v1311 = vpop.f32.mrf.mxu0
    %1312 = vmatprep.mubr.f32.mxu0 0.0
    %1313 = vmatmul.mubr.f32.gmra.mxu0 %v1226
    %v1314 = vpop.f32.mrf.mxu0
    %v1315 = vadd.f32 %v1220, %v1314
    %v1316 = vpop.f32.mrf.mxu0
    %1317 = vmatprep.mubr.f32.mxu0 0.0
    %1318 = vmatmul.mubr.f32.gmra.mxu0 %v1229
    %v1319 = vpop.f32.mrf.mxu0
    %v1320 = vadd.f32 %v1220, %v1319
    %v1321 = vpop.f32.mrf.mxu0
    %1322 = vmatprep.mubr.f32.mxu0 0.0
    %1323 = vmatmul.mubr.f32.gmra.mxu0 %v1232
    %v1324 = vpop.f32.mrf.mxu0
    %v1325 = vadd.f32 %v1220, %v1324
    %v1326 = vpop.f32.mrf.mxu0
    %1327 = vmatprep.mubr.f32.mxu0 0.0
    %1328 = vmatmul.mubr.f32.gmra.mxu0 %v1235
    %v1329 = vpop.f32.mrf.mxu0
    %v1330 = vadd.f32 %v1220, %v1329
    %v1331 = vpop.f32.mrf.mxu0
    %1332 = vmatprep.mubr.f32.mxu0 0.0
    %1333 = vmatmul.mubr.f32.gmra.mxu0 %v1238
    %v1334 = vpop.f32.mrf.mxu0
    %v1335 = vadd.f32 %v1220, %v1334
    %v1336 = vpop.f32.mrf.mxu0
    %1337 = vmatprep.mubr.f32.mxu0 0.0
    %1338 = vmatmul.mubr.f32.gmra.mxu0 %v1241
    %v1339 = vpop.f32.mrf.mxu0
    %v1340 = vadd.f32 %v1220, %v1339
    %v1341 = vpop.f32.mrf.mxu0
    %1342 = vdwg.mxu0
    %1343 = vst [vmem:[%s8] sm:$0xff] 0.0
    %1344 = vst [vmem:[%s8 + $0x8] sm:$0xff] %v1310
    %1345 = vst [vmem:[%s8 + $0x10] sm:$0xff] %v1315
    %1346 = vst [vmem:[%s8 + $0x18] sm:$0xff] %v1320
    %1347 = vst [vmem:[%s8 + $0x20] sm:$0xff] %v1325
    %1348 = vst [vmem:[%s8 + $0x28] sm:$0xff] %v1330
    %1349 = vst [vmem:[%s8 + $0x30] sm:$0xff] %v1335
    %1350 = vst [vmem:[%s8 + $0x38] sm:$0xff] %v1340
    // Predicated region
    $region46: #{caption_net_forward.1} parent=1 // pred_check
      _
    $region47: #{caption_net_forward.1} parent=1 // pred_check_branch
      %1352 = sbr.rel (0) target = $region49
    $region48: #{caption_net_forward.1} parent=1 // pred_region
      _
    $region49: #{caption_net_forward.1} parent=1 // pred_fallthru
      _
    // Predicated region
    $region50: #{caption_net_forward.1} parent=1 // pred_check
      _
    $region51: #{caption_net_forward.1} parent=1 // pred_check_branch
      %1354 = sbr.rel (0) target = $region53
    $region52: #{caption_net_forward.1} parent=1 // pred_region
      _
    $region53: #{caption_net_forward.1} parent=1 // pred_fallthru
      _
    %1355 = vsyncpa [#allocation4], 1
    %1356 = vsyncpa [#allocation6], 1

</llo_original>
